<compile_context>
chip_gen: v7x
topology: tpu7x:2x2x1
jax: 0.10.0
libtpu: 0.0.40
codegen_flags: <defaults>
</compile_context>

<pallas_src>
import math
import functools

import jax
import jax.numpy as jnp
from jax.experimental import pallas as pl
from jax.experimental.pallas import tpu as pltpu


def shared_block_kernel(h_ref, m_ref,
                        wq_ref, bq_ref, wk_ref, bk_ref, wv_ref, bv_ref,
                        wo_ref, bo_ref, g1_ref, be1_ref,
                        wi_ref, bi_ref, w2_ref, b2_ref, g2_ref, be2_ref,
                        o_ref, hstate_ref,
                        *, num_heads, head_dim, ln_eps):
    layer = pl.program_id(1)
    last_layer = pl.num_programs(1) - 1

    # Load the input hidden states into the carried f32 state on the first
    # layer application of this batch tile.
    @pl.when(layer == 0)
    def _():
        hstate_ref[...] = h_ref[...].astype(jnp.float32)

    bt, S, H = hstate_ref.shape
    x3 = hstate_ref[...]                       # (bt, S, H)  f32 carried state
    x2 = x3.reshape(bt * S, H)                 # flatten tokens -> MXU rows
    xb = x2.astype(jnp.bfloat16)
    mask = m_ref[...]                          # (bt, 1, S) additive mask, f32

    def dense(inp_bf16, w_ref, b_ref):
        # bf16 x bf16 matmul, f32 accumulate, f32 bias add.
        return (jnp.dot(inp_bf16, w_ref[...],
                        preferred_element_type=jnp.float32) + b_ref[...])

    # --- self attention ---------------------------------------------------
    q = dense(xb, wq_ref, bq_ref)              # (bt*S, H) f32
    k = dense(xb, wk_ref, bk_ref)
    v = dense(xb, wv_ref, bv_ref)

    scale = 1.0 / math.sqrt(head_dim)
    ctx_heads = []
    for h in range(num_heads):                 # static unroll (NH is small)
        sl = slice(h * head_dim, (h + 1) * head_dim)
        qh = q[:, sl].reshape(bt, S, head_dim).astype(jnp.bfloat16)
        kh = k[:, sl].reshape(bt, S, head_dim).astype(jnp.bfloat16)
        vh = v[:, sl].reshape(bt, S, head_dim).astype(jnp.bfloat16)
        # batched over the bt sequences; no explicit kh.T transpose
        s = jnp.einsum('bqd,bkd->bqk', qh, kh,
                       preferred_element_type=jnp.float32) * scale
        s = s + mask                           # (bt,S,S) + (bt,1,S)
        s = s - jnp.max(s, axis=-1, keepdims=True)
        p = jnp.exp(s)
        inv = pl.reciprocal(jnp.sum(p, axis=-1, keepdims=True), approx=True)
        p = (p * inv).astype(jnp.bfloat16)
        ctx_heads.append(jnp.einsum('bqk,bkd->bqd', p, vh,
                                    preferred_element_type=jnp.float32))
    ctx = jnp.concatenate(ctx_heads, axis=-1).reshape(bt * S, H)

    attn_out = dense(ctx.astype(jnp.bfloat16), wo_ref, bo_ref)

    def layer_norm(y, g, b):                   # f32 statistics
        mu = jnp.mean(y, axis=-1, keepdims=True)
        var = jnp.mean(jnp.square(y - mu), axis=-1, keepdims=True)
        return (y - mu) * jax.lax.rsqrt(var + ln_eps) * g + b

    h1 = layer_norm(x2 + attn_out, g1_ref[...], be1_ref[...])

    # --- feed forward -------------------------------------------------------
    inter = dense(h1.astype(jnp.bfloat16), wi_ref, bi_ref)
    # exact (erf) GELU, matching the PyTorch reference
    inter = 0.5 * inter * (1.0 + jax.lax.erf(inter * (1.0 / math.sqrt(2.0))))
    ffn = dense(inter.astype(jnp.bfloat16), w2_ref, b2_ref)

    h2 = layer_norm(h1 + ffn, g2_ref[...], be2_ref[...]).reshape(bt, S, H)

    # carry to the next layer step
    hstate_ref[...] = h2

    @pl.when(layer == last_layer)
    def _():
        o_ref[...] = h2.astype(o_ref.dtype)


def one_layer_encoder(hidden_states, attention_mask, params, *,
                      num_hidden_layers, num_heads, layer=-1,
                      ln_eps=1e-12, block_b=None):
    """ALBERT-style: the SAME TransformerBlock (shared weights) is applied
    num_hidden_layers times; returns all_hidden_states[layer] (default last).

    Since only hidden state `layer` is returned, we run exactly (layer+1 mod L)
    applications of the shared block inside one pallas_call.
    """
    B, S, H = hidden_states.shape
    I = params["wi"].shape[1]
    assert H % num_heads == 0
    head_dim = H // num_heads

    n_apply = (layer % num_hidden_layers) + 1  # number of block applications

    if block_b is None:
        # Whole batch resident per step at these sizes; shrink for large B*S
        # (must keep block_b*S activations + bf16 weights within VMEM).
        block_b = B
    assert B % block_b == 0

    f32, bf16 = jnp.float32, jnp.bfloat16
    hidden_states = hidden_states.astype(f32)
    mask_add = attention_mask.astype(f32).reshape(B, 1, S)

    # bf16 weight matrices (halves HBM traffic + VMEM footprint);
    # biases / LayerNorm params stay f32 (added to f32 accumulators).
    wq, wk = params["wq"].astype(bf16), params["wk"].astype(bf16)
    wv, wo = params["wv"].astype(bf16), params["wo"].astype(bf16)
    wi, w2 = params["wi"].astype(bf16), params["w2"].astype(bf16)
    bq, bk = params["bq"].astype(f32), params["bk"].astype(f32)
    bv, bo = params["bv"].astype(f32), params["bo"].astype(f32)
    bi, b2 = params["bi"].astype(f32), params["b2"].astype(f32)
    g1, be1 = params["g1"].astype(f32), params["be1"].astype(f32)
    g2, be2 = params["g2"].astype(f32), params["be2"].astype(f32)

    kernel = functools.partial(shared_block_kernel,
                               num_heads=num_heads, head_dim=head_dim,
                               ln_eps=ln_eps)

    # Weights/biases: constant index_map over both grid axes -> fetched once,
    # VMEM-resident across all layer steps.
    def rep(shape):
        nd = len(shape)
        return pl.BlockSpec(shape, lambda b, l, _nd=nd: (0,) * _nd)

    in_specs = [
        pl.BlockSpec((block_b, S, H), lambda b, l: (b, 0, 0)),   # hidden
        pl.BlockSpec((block_b, 1, S), lambda b, l: (b, 0, 0)),   # additive mask
        rep((H, H)), rep((1, H)),     # Wq, bq
        rep((H, H)), rep((1, H)),     # Wk, bk
        rep((H, H)), rep((1, H)),     # Wv, bv
        rep((H, H)), rep((1, H)),     # Wo, bo
        rep((1, H)), rep((1, H)),     # ln1 gamma, beta
        rep((H, I)), rep((1, I)),     # Wi, bi
        rep((I, H)), rep((1, H)),     # W2, b2
        rep((1, H)), rep((1, H)),     # ln2 gamma, beta
    ]
    out_spec = pl.BlockSpec((block_b, S, H), lambda b, l: (b, 0, 0))

    grid = (B // block_b, n_apply)

    return pl.pallas_call(
        kernel,
        out_shape=jax.ShapeDtypeStruct((B, S, H), hidden_states.dtype),
        grid_spec=pltpu.PrefetchScalarGridSpec(
            num_scalar_prefetch=0, grid=grid,
            in_specs=in_specs, out_specs=out_spec,
            scratch_shapes=[pltpu.VMEM((block_b, S, H), jnp.float32)]),
        compiler_params=pltpu.CompilerParams(
            # batch-tile axis parallel (megacore), layer axis sequential
            dimension_semantics=("parallel", "arbitrary"),
            # raised scoped-VMEM budget; safe on v5e/v6e (128 MiB) and under
            # v7x's 64 MiB physical VMEM.
            vmem_limit_bytes=48 * 1024 * 1024),
    )(hidden_states, mask_add,
      wq, bq, wk, bk, wv, bv, wo, bo, g1, be1, wi, bi, w2, b2, g2, be2)


if __name__ == "__main__":
    B, S, H, NH, I, L = 2, 8, 32, 4, 64, 3   # batch, seq, hidden, heads, ffn, layers

    key = jax.random.PRNGKey(0)
    ks = jax.random.split(key, 9)

    def w(k, shape):
        return (0.02 * jax.random.normal(k, shape)).astype(jnp.float32)

    params = {
        "wq": w(ks[0], (H, H)), "bq": jnp.zeros((1, H), jnp.float32),
        "wk": w(ks[1], (H, H)), "bk": jnp.zeros((1, H), jnp.float32),
        "wv": w(ks[2], (H, H)), "bv": jnp.zeros((1, H), jnp.float32),
        "wo": w(ks[3], (H, H)), "bo": jnp.zeros((1, H), jnp.float32),
        "g1": jnp.ones((1, H), jnp.float32), "be1": jnp.zeros((1, H), jnp.float32),
        "wi": w(ks[4], (H, I)), "bi": jnp.zeros((1, I), jnp.float32),
        "w2": w(ks[5], (I, H)), "b2": jnp.zeros((1, H), jnp.float32),
        "g2": jnp.ones((1, H), jnp.float32), "be2": jnp.zeros((1, H), jnp.float32),
    }

    hidden_states = jax.random.normal(ks[6], (B, S, H), jnp.float32)

    # binary padding mask -> additive extended mask (BERT convention)
    keep = jnp.ones((B, S), jnp.float32).at[1, -2:].set(0.0)
    attention_mask = ((1.0 - keep) * -10000.0).reshape(B, 1, S)

    out = one_layer_encoder(hidden_states, attention_mask, params,
                            num_hidden_layers=L, num_heads=NH, layer=-1)
    jax.block_until_ready(out)
    assert out.shape == (B, S, H) and out.dtype == jnp.float32
    print("KERNEL_OK")
</pallas_src>

<mosaic_0001>
module attributes {stable_mosaic.version = 11 : i64} {
  func.func @shared_block_kernel(%arg0: i32, %arg1: i32, %arg2: memref<2x8x32xf32, #tpu.memory_space<vmem>>, %arg3: memref<2x1x8xf32, #tpu.memory_space<vmem>>, %arg4: memref<32x32xbf16, #tpu.memory_space<vmem>>, %arg5: memref<1x32xf32, #tpu.memory_space<vmem>>, %arg6: memref<32x32xbf16, #tpu.memory_space<vmem>>, %arg7: memref<1x32xf32, #tpu.memory_space<vmem>>, %arg8: memref<32x32xbf16, #tpu.memory_space<vmem>>, %arg9: memref<1x32xf32, #tpu.memory_space<vmem>>, %arg10: memref<32x32xbf16, #tpu.memory_space<vmem>>, %arg11: memref<1x32xf32, #tpu.memory_space<vmem>>, %arg12: memref<1x32xf32, #tpu.memory_space<vmem>>, %arg13: memref<1x32xf32, #tpu.memory_space<vmem>>, %arg14: memref<32x64xbf16, #tpu.memory_space<vmem>>, %arg15: memref<1x64xf32, #tpu.memory_space<vmem>>, %arg16: memref<64x32xbf16, #tpu.memory_space<vmem>>, %arg17: memref<1x32xf32, #tpu.memory_space<vmem>>, %arg18: memref<1x32xf32, #tpu.memory_space<vmem>>, %arg19: memref<1x32xf32, #tpu.memory_space<vmem>>, %arg20: memref<2x8x32xf32, #tpu.memory_space<vmem>>, %arg21: memref<2x8x32xf32, #tpu.memory_space<vmem>>) attributes {dimension_semantics = [#tpu.dimension_semantics<parallel>, #tpu.dimension_semantics<arbitrary>], iteration_bounds = array<i64: 1, 3>, scalar_prefetch = 0 : i64, scratch_operands = 1 : i64, tpu.core_type = #tpu.core_type<tc>, window_params = [{transform_indices = @transform_0, window_bounds = array<i64: 2, 8, 32>}, {transform_indices = @transform_1, window_bounds = array<i64: 2, 1, 8>}, {pipeline_mode = #tpu.pipeline_mode<synchronous>, transform_indices = @transform_2, window_bounds = array<i64: 32, 32>}, {pipeline_mode = #tpu.pipeline_mode<synchronous>, transform_indices = @transform_3, window_bounds = array<i64: 1, 32>}, {pipeline_mode = #tpu.pipeline_mode<synchronous>, transform_indices = @transform_4, window_bounds = array<i64: 32, 32>}, {pipeline_mode = #tpu.pipeline_mode<synchronous>, transform_indices = @transform_5, window_bounds = array<i64: 1, 32>}, {pipeline_mode = #tpu.pipeline_mode<synchronous>, transform_indices = @transform_6, window_bounds = array<i64: 32, 32>}, {pipeline_mode = #tpu.pipeline_mode<synchronous>, transform_indices = @transform_7, window_bounds = array<i64: 1, 32>}, {pipeline_mode = #tpu.pipeline_mode<synchronous>, transform_indices = @transform_8, window_bounds = array<i64: 32, 32>}, {pipeline_mode = #tpu.pipeline_mode<synchronous>, transform_indices = @transform_9, window_bounds = array<i64: 1, 32>}, {pipeline_mode = #tpu.pipeline_mode<synchronous>, transform_indices = @transform_10, window_bounds = array<i64: 1, 32>}, {pipeline_mode = #tpu.pipeline_mode<synchronous>, transform_indices = @transform_11, window_bounds = array<i64: 1, 32>}, {pipeline_mode = #tpu.pipeline_mode<synchronous>, transform_indices = @transform_12, window_bounds = array<i64: 32, 64>}, {pipeline_mode = #tpu.pipeline_mode<synchronous>, transform_indices = @transform_13, window_bounds = array<i64: 1, 64>}, {pipeline_mode = #tpu.pipeline_mode<synchronous>, transform_indices = @transform_14, window_bounds = array<i64: 64, 32>}, {pipeline_mode = #tpu.pipeline_mode<synchronous>, transform_indices = @transform_15, window_bounds = array<i64: 1, 32>}, {pipeline_mode = #tpu.pipeline_mode<synchronous>, transform_indices = @transform_16, window_bounds = array<i64: 1, 32>}, {pipeline_mode = #tpu.pipeline_mode<synchronous>, transform_indices = @transform_17, window_bounds = array<i64: 1, 32>}, {transform_indices = @transform_18, window_bounds = array<i64: 2, 8, 32>}]} {
    %c0_i32 = arith.constant 0 : i32
    %0 = arith.cmpi eq, %arg1, %c0_i32 : i32
    %1 = arith.extui %0 : i1 to i32
    %c0_i32_0 = arith.constant 0 : i32
    %2 = arith.cmpi ne, %1, %c0_i32_0 : i32
    scf.if %2 {
      %c0_80 = arith.constant 0 : index
      %c0_81 = arith.constant 0 : index
      %c0_82 = arith.constant 0 : index
      %209 = vector.load %arg2[%c0_80, %c0_81, %c0_82] : memref<2x8x32xf32, #tpu.memory_space<vmem>>, vector<2x8x32xf32>
      %c0_83 = arith.constant 0 : index
      %c0_84 = arith.constant 0 : index
      %c0_85 = arith.constant 0 : index
      %210 = vector.load %arg21[%c0_83, %c0_84, %c0_85] : memref<2x8x32xf32, #tpu.memory_space<vmem>>, vector<2x8x32xf32>
      tpu.vector_store %arg21[%c0_83, %c0_84, %c0_85], %209 {strides = array<i32>} : memref<2x8x32xf32, #tpu.memory_space<vmem>>, vector<2x8x32xf32>,
    } else {
    }
    %c0 = arith.constant 0 : index
    %c0_1 = arith.constant 0 : index
    %c0_2 = arith.constant 0 : index
    %3 = vector.load %arg21[%c0, %c0_1, %c0_2] : memref<2x8x32xf32, #tpu.memory_space<vmem>>, vector<2x8x32xf32>
    %4 = vector.shape_cast %3 : vector<2x8x32xf32> to vector<16x32xf32>
    %5 = arith.truncf %4 : vector<16x32xf32> to vector<16x32xbf16>
    %c0_3 = arith.constant 0 : index
    %c0_4 = arith.constant 0 : index
    %c0_5 = arith.constant 0 : index
    %6 = vector.load %arg3[%c0_3, %c0_4, %c0_5] : memref<2x1x8xf32, #tpu.memory_space<vmem>>, vector<2x1x8xf32>
    %c0_6 = arith.constant 0 : index
    %c0_7 = arith.constant 0 : index
    %7 = vector.load %arg4[%c0_6, %c0_7] : memref<32x32xbf16, #tpu.memory_space<vmem>>, vector<32x32xbf16>
    %cst = arith.constant dense<0.000000e+00> : vector<16x32xf32>
    %8 = tpu.matmul %5, %7, %cst {dimension_numbers = #tpu.dot_dimension_numbers<[1], [0], [0], [1], [0, 0, 1, 1], [], []>} : vector<16x32xbf16>, vector<32x32xbf16>, vector<16x32xf32> -> vector<16x32xf32>
    %c0_8 = arith.constant 0 : index
    %c0_9 = arith.constant 0 : index
    %9 = vector.load %arg5[%c0_8, %c0_9] : memref<1x32xf32, #tpu.memory_space<vmem>>, vector<1x32xf32>
    %10 = vector.broadcast %9 : vector<1x32xf32> to vector<16x32xf32>
    %11 = arith.addf %8, %10 : vector<16x32xf32>
    %c0_10 = arith.constant 0 : index
    %c0_11 = arith.constant 0 : index
    %12 = vector.load %arg6[%c0_10, %c0_11] : memref<32x32xbf16, #tpu.memory_space<vmem>>, vector<32x32xbf16>
    %cst_12 = arith.constant dense<0.000000e+00> : vector<16x32xf32>
    %13 = tpu.matmul %5, %12, %cst_12 {dimension_numbers = #tpu.dot_dimension_numbers<[1], [0], [0], [1], [0, 0, 1, 1], [], []>} : vector<16x32xbf16>, vector<32x32xbf16>, vector<16x32xf32> -> vector<16x32xf32>
    %c0_13 = arith.constant 0 : index
    %c0_14 = arith.constant 0 : index
    %14 = vector.load %arg7[%c0_13, %c0_14] : memref<1x32xf32, #tpu.memory_space<vmem>>, vector<1x32xf32>
    %15 = vector.broadcast %14 : vector<1x32xf32> to vector<16x32xf32>
    %16 = arith.addf %13, %15 : vector<16x32xf32>
    %c0_15 = arith.constant 0 : index
    %c0_16 = arith.constant 0 : index
    %17 = vector.load %arg8[%c0_15, %c0_16] : memref<32x32xbf16, #tpu.memory_space<vmem>>, vector<32x32xbf16>
    %cst_17 = arith.constant dense<0.000000e+00> : vector<16x32xf32>
    %18 = tpu.matmul %5, %17, %cst_17 {dimension_numbers = #tpu.dot_dimension_numbers<[1], [0], [0], [1], [0, 0, 1, 1], [], []>} : vector<16x32xbf16>, vector<32x32xbf16>, vector<16x32xf32> -> vector<16x32xf32>
    %c0_18 = arith.constant 0 : index
    %c0_19 = arith.constant 0 : index
    %19 = vector.load %arg9[%c0_18, %c0_19] : memref<1x32xf32, #tpu.memory_space<vmem>>, vector<1x32xf32>
    %20 = vector.broadcast %19 : vector<1x32xf32> to vector<16x32xf32>
    %21 = arith.addf %18, %20 : vector<16x32xf32>
    %22 = vector.extract_strided_slice %11 {offsets = [0, 0], sizes = [16, 8], strides = [1, 1]} : vector<16x32xf32> to vector<16x8xf32>
    %23 = vector.shape_cast %22 : vector<16x8xf32> to vector<2x8x8xf32>
    %24 = arith.truncf %23 : vector<2x8x8xf32> to vector<2x8x8xbf16>
    %25 = vector.extract_strided_slice %16 {offsets = [0, 0], sizes = [16, 8], strides = [1, 1]} : vector<16x32xf32> to vector<16x8xf32>
    %26 = vector.shape_cast %25 : vector<16x8xf32> to vector<2x8x8xf32>
    %27 = arith.truncf %26 : vector<2x8x8xf32> to vector<2x8x8xbf16>
    %28 = vector.extract_strided_slice %21 {offsets = [0, 0], sizes = [16, 8], strides = [1, 1]} : vector<16x32xf32> to vector<16x8xf32>
    %29 = vector.shape_cast %28 : vector<16x8xf32> to vector<2x8x8xf32>
    %30 = arith.truncf %29 : vector<2x8x8xf32> to vector<2x8x8xbf16>
    "tpu.trace_start"() <{level = 10 : i32, message = "bqd,bkd->bqk"}> : () -> ()
    %cst_20 = arith.constant dense<0.000000e+00> : vector<2x8x8xf32>
    %31 = tpu.matmul %24, %27, %cst_20 {dimension_numbers = #tpu.dot_dimension_numbers<[2], [2], [1], [1], [0, 0, 0, 1, 1, 1], [0], [0]>} : vector<2x8x8xbf16>, vector<2x8x8xbf16>, vector<2x8x8xf32> -> vector<2x8x8xf32>
    "tpu.trace_stop"() : () -> ()
    %cst_21 = arith.constant 0.353553385 : f32
    %32 = vector.broadcast %cst_21 : f32 to vector<2x8x8xf32>
    %33 = arith.mulf %31, %32 : vector<2x8x8xf32>
    %34 = vector.broadcast %6 : vector<2x1x8xf32> to vector<2x8x8xf32>
    %35 = arith.addf %33, %34 : vector<2x8x8xf32>
    %cst_22 = arith.constant dense<0xFF800000> : vector<2x8xf32>
    %36 = vector.multi_reduction <maximumf>, %35, %cst_22 [2] : vector<2x8x8xf32> to vector<2x8xf32>
    %37 = vector.shape_cast %36 : vector<2x8xf32> to vector<2x8x1xf32>
    %38 = vector.broadcast %37 : vector<2x8x1xf32> to vector<2x8x8xf32>
    %39 = arith.subf %35, %38 : vector<2x8x8xf32>
    %40 = math.exp %39 : vector<2x8x8xf32>
    %cst_23 = arith.constant dense<0.000000e+00> : vector<2x8xf32>
    %41 = vector.multi_reduction <add>, %40, %cst_23 [2] : vector<2x8x8xf32> to vector<2x8xf32>
    %42 = vector.shape_cast %41 : vector<2x8xf32> to vector<2x8x1xf32>
    %43 = tpu.reciprocal %42 {approx = true} : vector<2x8x1xf32> -> vector<2x8x1xf32>
    %44 = vector.broadcast %43 : vector<2x8x1xf32> to vector<2x8x8xf32>
    %45 = arith.mulf %40, %44 : vector<2x8x8xf32>
    %46 = arith.truncf %45 : vector<2x8x8xf32> to vector<2x8x8xbf16>
    "tpu.trace_start"() <{level = 10 : i32, message = "bqk,bkd->bqd"}> : () -> ()
    %cst_24 = arith.constant dense<0.000000e+00> : vector<2x8x8xf32>
    %47 = tpu.matmul %46, %30, %cst_24 {dimension_numbers = #tpu.dot_dimension_numbers<[2], [1], [1], [2], [0, 0, 0, 1, 1, 2], [0], [0]>} : vector<2x8x8xbf16>, vector<2x8x8xbf16>, vector<2x8x8xf32> -> vector<2x8x8xf32>
    "tpu.trace_stop"() : () -> ()
    %48 = vector.extract_strided_slice %11 {offsets = [0, 8], sizes = [16, 8], strides = [1, 1]} : vector<16x32xf32> to vector<16x8xf32>
    %49 = vector.shape_cast %48 : vector<16x8xf32> to vector<2x8x8xf32>
    %50 = arith.truncf %49 : vector<2x8x8xf32> to vector<2x8x8xbf16>
    %51 = vector.extract_strided_slice %16 {offsets = [0, 8], sizes = [16, 8], strides = [1, 1]} : vector<16x32xf32> to vector<16x8xf32>
    %52 = vector.shape_cast %51 : vector<16x8xf32> to vector<2x8x8xf32>
    %53 = arith.truncf %52 : vector<2x8x8xf32> to vector<2x8x8xbf16>
    %54 = vector.extract_strided_slice %21 {offsets = [0, 8], sizes = [16, 8], strides = [1, 1]} : vector<16x32xf32> to vector<16x8xf32>
    %55 = vector.shape_cast %54 : vector<16x8xf32> to vector<2x8x8xf32>
    %56 = arith.truncf %55 : vector<2x8x8xf32> to vector<2x8x8xbf16>
    "tpu.trace_start"() <{level = 10 : i32, message = "bqd,bkd->bqk"}> : () -> ()
    %cst_25 = arith.constant dense<0.000000e+00> : vector<2x8x8xf32>
    %57 = tpu.matmul %50, %53, %cst_25 {dimension_numbers = #tpu.dot_dimension_numbers<[2], [2], [1], [1], [0, 0, 0, 1, 1, 1], [0], [0]>} : vector<2x8x8xbf16>, vector<2x8x8xbf16>, vector<2x8x8xf32> -> vector<2x8x8xf32>
    "tpu.trace_stop"() : () -> ()
    %cst_26 = arith.constant 0.353553385 : f32
    %58 = vector.broadcast %cst_26 : f32 to vector<2x8x8xf32>
    %59 = arith.mulf %57, %58 : vector<2x8x8xf32>
    %60 = vector.broadcast %6 : vector<2x1x8xf32> to vector<2x8x8xf32>
    %61 = arith.addf %59, %60 : vector<2x8x8xf32>
    %cst_27 = arith.constant dense<0xFF800000> : vector<2x8xf32>
    %62 = vector.multi_reduction <maximumf>, %61, %cst_27 [2] : vector<2x8x8xf32> to vector<2x8xf32>
    %63 = vector.shape_cast %62 : vector<2x8xf32> to vector<2x8x1xf32>
    %64 = vector.broadcast %63 : vector<2x8x1xf32> to vector<2x8x8xf32>
    %65 = arith.subf %61, %64 : vector<2x8x8xf32>
    %66 = math.exp %65 : vector<2x8x8xf32>
    %cst_28 = arith.constant dense<0.000000e+00> : vector<2x8xf32>
    %67 = vector.multi_reduction <add>, %66, %cst_28 [2] : vector<2x8x8xf32> to vector<2x8xf32>
    %68 = vector.shape_cast %67 : vector<2x8xf32> to vector<2x8x1xf32>
    %69 = tpu.reciprocal %68 {approx = true} : vector<2x8x1xf32> -> vector<2x8x1xf32>
    %70 = vector.broadcast %69 : vector<2x8x1xf32> to vector<2x8x8xf32>
    %71 = arith.mulf %66, %70 : vector<2x8x8xf32>
    %72 = arith.truncf %71 : vector<2x8x8xf32> to vector<2x8x8xbf16>
    "tpu.trace_start"() <{level = 10 : i32, message = "bqk,bkd->bqd"}> : () -> ()
    %cst_29 = arith.constant dense<0.000000e+00> : vector<2x8x8xf32>
    %73 = tpu.matmul %72, %56, %cst_29 {dimension_numbers = #tpu.dot_dimension_numbers<[2], [1], [1], [2], [0, 0, 0, 1, 1, 2], [0], [0]>} : vector<2x8x8xbf16>, vector<2x8x8xbf16>, vector<2x8x8xf32> -> vector<2x8x8xf32>
    "tpu.trace_stop"() : () -> ()
    %74 = vector.extract_strided_slice %11 {offsets = [0, 16], sizes = [16, 8], strides = [1, 1]} : vector<16x32xf32> to vector<16x8xf32>
    %75 = vector.shape_cast %74 : vector<16x8xf32> to vector<2x8x8xf32>
    %76 = arith.truncf %75 : vector<2x8x8xf32> to vector<2x8x8xbf16>
    %77 = vector.extract_strided_slice %16 {offsets = [0, 16], sizes = [16, 8], strides = [1, 1]} : vector<16x32xf32> to vector<16x8xf32>
    %78 = vector.shape_cast %77 : vector<16x8xf32> to vector<2x8x8xf32>
    %79 = arith.truncf %78 : vector<2x8x8xf32> to vector<2x8x8xbf16>
    %80 = vector.extract_strided_slice %21 {offsets = [0, 16], sizes = [16, 8], strides = [1, 1]} : vector<16x32xf32> to vector<16x8xf32>
    %81 = vector.shape_cast %80 : vector<16x8xf32> to vector<2x8x8xf32>
    %82 = arith.truncf %81 : vector<2x8x8xf32> to vector<2x8x8xbf16>
    "tpu.trace_start"() <{level = 10 : i32, message = "bqd,bkd->bqk"}> : () -> ()
    %cst_30 = arith.constant dense<0.000000e+00> : vector<2x8x8xf32>
    %83 = tpu.matmul %76, %79, %cst_30 {dimension_numbers = #tpu.dot_dimension_numbers<[2], [2], [1], [1], [0, 0, 0, 1, 1, 1], [0], [0]>} : vector<2x8x8xbf16>, vector<2x8x8xbf16>, vector<2x8x8xf32> -> vector<2x8x8xf32>
    "tpu.trace_stop"() : () -> ()
    %cst_31 = arith.constant 0.353553385 : f32
    %84 = vector.broadcast %cst_31 : f32 to vector<2x8x8xf32>
    %85 = arith.mulf %83, %84 : vector<2x8x8xf32>
    %86 = vector.broadcast %6 : vector<2x1x8xf32> to vector<2x8x8xf32>
    %87 = arith.addf %85, %86 : vector<2x8x8xf32>
    %cst_32 = arith.constant dense<0xFF800000> : vector<2x8xf32>
    %88 = vector.multi_reduction <maximumf>, %87, %cst_32 [2] : vector<2x8x8xf32> to vector<2x8xf32>
    %89 = vector.shape_cast %88 : vector<2x8xf32> to vector<2x8x1xf32>
    %90 = vector.broadcast %89 : vector<2x8x1xf32> to vector<2x8x8xf32>
    %91 = arith.subf %87, %90 : vector<2x8x8xf32>
    %92 = math.exp %91 : vector<2x8x8xf32>
    %cst_33 = arith.constant dense<0.000000e+00> : vector<2x8xf32>
    %93 = vector.multi_reduction <add>, %92, %cst_33 [2] : vector<2x8x8xf32> to vector<2x8xf32>
    %94 = vector.shape_cast %93 : vector<2x8xf32> to vector<2x8x1xf32>
    %95 = tpu.reciprocal %94 {approx = true} : vector<2x8x1xf32> -> vector<2x8x1xf32>
    %96 = vector.broadcast %95 : vector<2x8x1xf32> to vector<2x8x8xf32>
    %97 = arith.mulf %92, %96 : vector<2x8x8xf32>
    %98 = arith.truncf %97 : vector<2x8x8xf32> to vector<2x8x8xbf16>
    "tpu.trace_start"() <{level = 10 : i32, message = "bqk,bkd->bqd"}> : () -> ()
    %cst_34 = arith.constant dense<0.000000e+00> : vector<2x8x8xf32>
    %99 = tpu.matmul %98, %82, %cst_34 {dimension_numbers = #tpu.dot_dimension_numbers<[2], [1], [1], [2], [0, 0, 0, 1, 1, 2], [0], [0]>} : vector<2x8x8xbf16>, vector<2x8x8xbf16>, vector<2x8x8xf32> -> vector<2x8x8xf32>
    "tpu.trace_stop"() : () -> ()
    %100 = vector.extract_strided_slice %11 {offsets = [0, 24], sizes = [16, 8], strides = [1, 1]} : vector<16x32xf32> to vector<16x8xf32>
    %101 = vector.shape_cast %100 : vector<16x8xf32> to vector<2x8x8xf32>
    %102 = arith.truncf %101 : vector<2x8x8xf32> to vector<2x8x8xbf16>
    %103 = vector.extract_strided_slice %16 {offsets = [0, 24], sizes = [16, 8], strides = [1, 1]} : vector<16x32xf32> to vector<16x8xf32>
    %104 = vector.shape_cast %103 : vector<16x8xf32> to vector<2x8x8xf32>
    %105 = arith.truncf %104 : vector<2x8x8xf32> to vector<2x8x8xbf16>
    %106 = vector.extract_strided_slice %21 {offsets = [0, 24], sizes = [16, 8], strides = [1, 1]} : vector<16x32xf32> to vector<16x8xf32>
    %107 = vector.shape_cast %106 : vector<16x8xf32> to vector<2x8x8xf32>
    %108 = arith.truncf %107 : vector<2x8x8xf32> to vector<2x8x8xbf16>
    "tpu.trace_start"() <{level = 10 : i32, message = "bqd,bkd->bqk"}> : () -> ()
    %cst_35 = arith.constant dense<0.000000e+00> : vector<2x8x8xf32>
    %109 = tpu.matmul %102, %105, %cst_35 {dimension_numbers = #tpu.dot_dimension_numbers<[2], [2], [1], [1], [0, 0, 0, 1, 1, 1], [0], [0]>} : vector<2x8x8xbf16>, vector<2x8x8xbf16>, vector<2x8x8xf32> -> vector<2x8x8xf32>
    "tpu.trace_stop"() : () -> ()
    %cst_36 = arith.constant 0.353553385 : f32
    %110 = vector.broadcast %cst_36 : f32 to vector<2x8x8xf32>
    %111 = arith.mulf %109, %110 : vector<2x8x8xf32>
    %112 = vector.broadcast %6 : vector<2x1x8xf32> to vector<2x8x8xf32>
    %113 = arith.addf %111, %112 : vector<2x8x8xf32>
    %cst_37 = arith.constant dense<0xFF800000> : vector<2x8xf32>
    %114 = vector.multi_reduction <maximumf>, %113, %cst_37 [2] : vector<2x8x8xf32> to vector<2x8xf32>
    %115 = vector.shape_cast %114 : vector<2x8xf32> to vector<2x8x1xf32>
    %116 = vector.broadcast %115 : vector<2x8x1xf32> to vector<2x8x8xf32>
    %117 = arith.subf %113, %116 : vector<2x8x8xf32>
    %118 = math.exp %117 : vector<2x8x8xf32>
    %cst_38 = arith.constant dense<0.000000e+00> : vector<2x8xf32>
    %119 = vector.multi_reduction <add>, %118, %cst_38 [2] : vector<2x8x8xf32> to vector<2x8xf32>
    %120 = vector.shape_cast %119 : vector<2x8xf32> to vector<2x8x1xf32>
    %121 = tpu.reciprocal %120 {approx = true} : vector<2x8x1xf32> -> vector<2x8x1xf32>
    %122 = vector.broadcast %121 : vector<2x8x1xf32> to vector<2x8x8xf32>
    %123 = arith.mulf %118, %122 : vector<2x8x8xf32>
    %124 = arith.truncf %123 : vector<2x8x8xf32> to vector<2x8x8xbf16>
    "tpu.trace_start"() <{level = 10 : i32, message = "bqk,bkd->bqd"}> : () -> ()
    %cst_39 = arith.constant dense<0.000000e+00> : vector<2x8x8xf32>
    %125 = tpu.matmul %124, %108, %cst_39 {dimension_numbers = #tpu.dot_dimension_numbers<[2], [1], [1], [2], [0, 0, 0, 1, 1, 2], [0], [0]>} : vector<2x8x8xbf16>, vector<2x8x8xbf16>, vector<2x8x8xf32> -> vector<2x8x8xf32>
    "tpu.trace_stop"() : () -> ()
    %126 = tpu.concatenate %47, %73, %99, %125 in 2 : vector<2x8x8xf32>, vector<2x8x8xf32>, vector<2x8x8xf32>, vector<2x8x8xf32> -> vector<2x8x32xf32>
    %127 = vector.shape_cast %126 : vector<2x8x32xf32> to vector<16x32xf32>
    %128 = arith.truncf %127 : vector<16x32xf32> to vector<16x32xbf16>
    %c0_40 = arith.constant 0 : index
    %c0_41 = arith.constant 0 : index
    %129 = vector.load %arg10[%c0_40, %c0_41] : memref<32x32xbf16, #tpu.memory_space<vmem>>, vector<32x32xbf16>
    %cst_42 = arith.constant dense<0.000000e+00> : vector<16x32xf32>
    %130 = tpu.matmul %128, %129, %cst_42 {dimension_numbers = #tpu.dot_dimension_numbers<[1], [0], [0], [1], [0, 0, 1, 1], [], []>} : vector<16x32xbf16>, vector<32x32xbf16>, vector<16x32xf32> -> vector<16x32xf32>
    %c0_43 = arith.constant 0 : index
    %c0_44 = arith.constant 0 : index
    %131 = vector.load %arg11[%c0_43, %c0_44] : memref<1x32xf32, #tpu.memory_space<vmem>>, vector<1x32xf32>
    %132 = vector.broadcast %131 : vector<1x32xf32> to vector<16x32xf32>
    %133 = arith.addf %130, %132 : vector<16x32xf32>
    %134 = arith.addf %4, %133 : vector<16x32xf32>
    %c0_45 = arith.constant 0 : index
    %c0_46 = arith.constant 0 : index
    %135 = vector.load %arg12[%c0_45, %c0_46] : memref<1x32xf32, #tpu.memory_space<vmem>>, vector<1x32xf32>
    %c0_47 = arith.constant 0 : index
    %c0_48 = arith.constant 0 : index
    %136 = vector.load %arg13[%c0_47, %c0_48] : memref<1x32xf32, #tpu.memory_space<vmem>>, vector<1x32xf32>
    %cst_49 = arith.constant dense<0.000000e+00> : vector<16xf32>
    %137 = vector.multi_reduction <add>, %134, %cst_49 [1] : vector<16x32xf32> to vector<16xf32>
    %138 = vector.shape_cast %137 : vector<16xf32> to vector<16x1xf32>
    %cst_50 = arith.constant 3.200000e+01 : f32
    %139 = vector.broadcast %cst_50 : f32 to vector<16x1xf32>
    %140 = arith.divf %138, %139 : vector<16x1xf32>
    %141 = vector.broadcast %140 : vector<16x1xf32> to vector<16x32xf32>
    %142 = arith.subf %134, %141 : vector<16x32xf32>
    %143 = arith.mulf %142, %142 : vector<16x32xf32>
    %cst_51 = arith.constant dense<0.000000e+00> : vector<16xf32>
    %144 = vector.multi_reduction <add>, %143, %cst_51 [1] : vector<16x32xf32> to vector<16xf32>
    %145 = vector.shape_cast %144 : vector<16xf32> to vector<16x1xf32>
    %cst_52 = arith.constant 3.200000e+01 : f32
    %146 = vector.broadcast %cst_52 : f32 to vector<16x1xf32>
    %147 = arith.divf %145, %146 : vector<16x1xf32>
    %148 = vector.broadcast %140 : vector<16x1xf32> to vector<16x32xf32>
    %149 = arith.subf %134, %148 : vector<16x32xf32>
    %cst_53 = arith.constant 9.99999996E-13 : f32
    %150 = vector.broadcast %cst_53 : f32 to vector<16x1xf32>
    %151 = arith.addf %147, %150 : vector<16x1xf32>
    %152 = math.rsqrt %151 : vector<16x1xf32>
    %153 = vector.broadcast %152 : vector<16x1xf32> to vector<16x32xf32>
    %154 = arith.mulf %149, %153 : vector<16x32xf32>
    %155 = vector.broadcast %135 : vector<1x32xf32> to vector<16x32xf32>
    %156 = arith.mulf %154, %155 : vector<16x32xf32>
    %157 = vector.broadcast %136 : vector<1x32xf32> to vector<16x32xf32>
    %158 = arith.addf %156, %157 : vector<16x32xf32>
    %159 = arith.truncf %158 : vector<16x32xf32> to vector<16x32xbf16>
    %c0_54 = arith.constant 0 : index
    %c0_55 = arith.constant 0 : index
    %160 = vector.load %arg14[%c0_54, %c0_55] : memref<32x64xbf16, #tpu.memory_space<vmem>>, vector<32x64xbf16>
    %cst_56 = arith.constant dense<0.000000e+00> : vector<16x64xf32>
    %161 = tpu.matmul %159, %160, %cst_56 {dimension_numbers = #tpu.dot_dimension_numbers<[1], [0], [0], [1], [0, 0, 1, 1], [], []>} : vector<16x32xbf16>, vector<32x64xbf16>, vector<16x64xf32> -> vector<16x64xf32>
    %c0_57 = arith.constant 0 : index
    %c0_58 = arith.constant 0 : index
    %162 = vector.load %arg15[%c0_57, %c0_58] : memref<1x64xf32, #tpu.memory_space<vmem>>, vector<1x64xf32>
    %163 = vector.broadcast %162 : vector<1x64xf32> to vector<16x64xf32>
    %164 = arith.addf %161, %163 : vector<16x64xf32>
    %cst_59 = arith.constant 5.000000e-01 : f32
    %165 = vector.broadcast %cst_59 : f32 to vector<16x64xf32>
    %166 = arith.mulf %165, %164 : vector<16x64xf32>
    %cst_60 = arith.constant 0.707106769 : f32
    %167 = vector.broadcast %cst_60 : f32 to vector<16x64xf32>
    %168 = arith.mulf %164, %167 : vector<16x64xf32>
    %169 = math.erf %168 : vector<16x64xf32>
    %cst_61 = arith.constant 1.000000e+00 : f32
    %170 = vector.broadcast %cst_61 : f32 to vector<16x64xf32>
    %171 = arith.addf %170, %169 : vector<16x64xf32>
    %172 = arith.mulf %166, %171 : vector<16x64xf32>
    %173 = arith.truncf %172 : vector<16x64xf32> to vector<16x64xbf16>
    %c0_62 = arith.constant 0 : index
    %c0_63 = arith.constant 0 : index
    %174 = vector.load %arg16[%c0_62, %c0_63] : memref<64x32xbf16, #tpu.memory_space<vmem>>, vector<64x32xbf16>
    %cst_64 = arith.constant dense<0.000000e+00> : vector<16x32xf32>
    %175 = tpu.matmul %173, %174, %cst_64 {dimension_numbers = #tpu.dot_dimension_numbers<[1], [0], [0], [1], [0, 0, 1, 1], [], []>} : vector<16x64xbf16>, vector<64x32xbf16>, vector<16x32xf32> -> vector<16x32xf32>
    %c0_65 = arith.constant 0 : index
    %c0_66 = arith.constant 0 : index
    %176 = vector.load %arg17[%c0_65, %c0_66] : memref<1x32xf32, #tpu.memory_space<vmem>>, vector<1x32xf32>
    %177 = vector.broadcast %176 : vector<1x32xf32> to vector<16x32xf32>
    %178 = arith.addf %175, %177 : vector<16x32xf32>
    %179 = arith.addf %158, %178 : vector<16x32xf32>
    %c0_67 = arith.constant 0 : index
    %c0_68 = arith.constant 0 : index
    %180 = vector.load %arg18[%c0_67, %c0_68] : memref<1x32xf32, #tpu.memory_space<vmem>>, vector<1x32xf32>
    %c0_69 = arith.constant 0 : index
    %c0_70 = arith.constant 0 : index
    %181 = vector.load %arg19[%c0_69, %c0_70] : memref<1x32xf32, #tpu.memory_space<vmem>>, vector<1x32xf32>
    %cst_71 = arith.constant dense<0.000000e+00> : vector<16xf32>
    %182 = vector.multi_reduction <add>, %179, %cst_71 [1] : vector<16x32xf32> to vector<16xf32>
    %183 = vector.shape_cast %182 : vector<16xf32> to vector<16x1xf32>
    %cst_72 = arith.constant 3.200000e+01 : f32
    %184 = vector.broadcast %cst_72 : f32 to vector<16x1xf32>
    %185 = arith.divf %183, %184 : vector<16x1xf32>
    %186 = vector.broadcast %185 : vector<16x1xf32> to vector<16x32xf32>
    %187 = arith.subf %179, %186 : vector<16x32xf32>
    %188 = arith.mulf %187, %187 : vector<16x32xf32>
    %cst_73 = arith.constant dense<0.000000e+00> : vector<16xf32>
    %189 = vector.multi_reduction <add>, %188, %cst_73 [1] : vector<16x32xf32> to vector<16xf32>
    %190 = vector.shape_cast %189 : vector<16xf32> to vector<16x1xf32>
    %cst_74 = arith.constant 3.200000e+01 : f32
    %191 = vector.broadcast %cst_74 : f32 to vector<16x1xf32>
    %192 = arith.divf %190, %191 : vector<16x1xf32>
    %193 = vector.broadcast %185 : vector<16x1xf32> to vector<16x32xf32>
    %194 = arith.subf %179, %193 : vector<16x32xf32>
    %cst_75 = arith.constant 9.99999996E-13 : f32
    %195 = vector.broadcast %cst_75 : f32 to vector<16x1xf32>
    %196 = arith.addf %192, %195 : vector<16x1xf32>
    %197 = math.rsqrt %196 : vector<16x1xf32>
    %198 = vector.broadcast %197 : vector<16x1xf32> to vector<16x32xf32>
    %199 = arith.mulf %194, %198 : vector<16x32xf32>
    %200 = vector.broadcast %180 : vector<1x32xf32> to vector<16x32xf32>
    %201 = arith.mulf %199, %200 : vector<16x32xf32>
    %202 = vector.broadcast %181 : vector<1x32xf32> to vector<16x32xf32>
    %203 = arith.addf %201, %202 : vector<16x32xf32>
    %204 = vector.shape_cast %203 : vector<16x32xf32> to vector<2x8x32xf32>
    %c0_76 = arith.constant 0 : index
    %c0_77 = arith.constant 0 : index
    %c0_78 = arith.constant 0 : index
    %205 = vector.load %arg21[%c0_76, %c0_77, %c0_78] : memref<2x8x32xf32, #tpu.memory_space<vmem>>, vector<2x8x32xf32>
    tpu.vector_store %arg21[%c0_76, %c0_77, %c0_78], %204 {strides = array<i32>} : memref<2x8x32xf32, #tpu.memory_space<vmem>>, vector<2x8x32xf32>,
    %c2_i32 = arith.constant 2 : i32
    %206 = arith.cmpi eq, %arg1, %c2_i32 : i32
    %207 = arith.extui %206 : i1 to i32
    %c0_i32_79 = arith.constant 0 : i32
    %208 = arith.cmpi ne, %207, %c0_i32_79 : i32
    scf.if %208 {
      %c0_80 = arith.constant 0 : index
      %c0_81 = arith.constant 0 : index
      %c0_82 = arith.constant 0 : index
      %209 = vector.load %arg20[%c0_80, %c0_81, %c0_82] : memref<2x8x32xf32, #tpu.memory_space<vmem>>, vector<2x8x32xf32>
      tpu.vector_store %arg20[%c0_80, %c0_81, %c0_82], %204 {strides = array<i32>} : memref<2x8x32xf32, #tpu.memory_space<vmem>>, vector<2x8x32xf32>,
    } else {
    }
    return
  }
  func.func @transform_0(%arg0: i32, %arg1: i32) -> (i32, i32, i32) {
    %c0_i32 = arith.constant 0 : i32
    %c0_i32_0 = arith.constant 0 : i32
    %c0_i32_1 = arith.constant 0 : i32
    return %arg0, %c0_i32, %c0_i32_0 : i32, i32, i32
  }
  func.func @transform_1(%arg0: i32, %arg1: i32) -> (i32, i32, i32) {
    %c0_i32 = arith.constant 0 : i32
    %c0_i32_0 = arith.constant 0 : i32
    %c0_i32_1 = arith.constant 0 : i32
    return %arg0, %c0_i32, %c0_i32_0 : i32, i32, i32
  }
  func.func @transform_2(%arg0: i32, %arg1: i32) -> (i32, i32) {
    %c0_i32 = arith.constant 0 : i32
    %c0_i32_0 = arith.constant 0 : i32
    %c0_i32_1 = arith.constant 0 : i32
    return %c0_i32, %c0_i32_0 : i32, i32
  }
  func.func @transform_3(%arg0: i32, %arg1: i32) -> (i32, i32) {
    %c0_i32 = arith.constant 0 : i32
    %c0_i32_0 = arith.constant 0 : i32
    %c0_i32_1 = arith.constant 0 : i32
    return %c0_i32, %c0_i32_0 : i32, i32
  }
  func.func @transform_4(%arg0: i32, %arg1: i32) -> (i32, i32) {
    %c0_i32 = arith.constant 0 : i32
    %c0_i32_0 = arith.constant 0 : i32
    %c0_i32_1 = arith.constant 0 : i32
    return %c0_i32, %c0_i32_0 : i32, i32
  }
  func.func @transform_5(%arg0: i32, %arg1: i32) -> (i32, i32) {
    %c0_i32 = arith.constant 0 : i32
    %c0_i32_0 = arith.constant 0 : i32
    %c0_i32_1 = arith.constant 0 : i32
    return %c0_i32, %c0_i32_0 : i32, i32
  }
  func.func @transform_6(%arg0: i32, %arg1: i32) -> (i32, i32) {
    %c0_i32 = arith.constant 0 : i32
    %c0_i32_0 = arith.constant 0 : i32
    %c0_i32_1 = arith.constant 0 : i32
    return %c0_i32, %c0_i32_0 : i32, i32
  }
  func.func @transform_7(%arg0: i32, %arg1: i32) -> (i32, i32) {
    %c0_i32 = arith.constant 0 : i32
    %c0_i32_0 = arith.constant 0 : i32
    %c0_i32_1 = arith.constant 0 : i32
    return %c0_i32, %c0_i32_0 : i32, i32
  }
  func.func @transform_8(%arg0: i32, %arg1: i32) -> (i32, i32) {
    %c0_i32 = arith.constant 0 : i32
    %c0_i32_0 = arith.constant 0 : i32
    %c0_i32_1 = arith.constant 0 : i32
    return %c0_i32, %c0_i32_0 : i32, i32
  }
  func.func @transform_9(%arg0: i32, %arg1: i32) -> (i32, i32) {
    %c0_i32 = arith.constant 0 : i32
    %c0_i32_0 = arith.constant 0 : i32
    %c0_i32_1 = arith.constant 0 : i32
    return %c0_i32, %c0_i32_0 : i32, i32
  }
  func.func @transform_10(%arg0: i32, %arg1: i32) -> (i32, i32) {
    %c0_i32 = arith.constant 0 : i32
    %c0_i32_0 = arith.constant 0 : i32
    %c0_i32_1 = arith.constant 0 : i32
    return %c0_i32, %c0_i32_0 : i32, i32
  }
  func.func @transform_11(%arg0: i32, %arg1: i32) -> (i32, i32) {
    %c0_i32 = arith.constant 0 : i32
    %c0_i32_0 = arith.constant 0 : i32
    %c0_i32_1 = arith.constant 0 : i32
    return %c0_i32, %c0_i32_0 : i32, i32
  }
  func.func @transform_12(%arg0: i32, %arg1: i32) -> (i32, i32) {
    %c0_i32 = arith.constant 0 : i32
    %c0_i32_0 = arith.constant 0 : i32
    %c0_i32_1 = arith.constant 0 : i32
    return %c0_i32, %c0_i32_0 : i32, i32
  }
  func.func @transform_13(%arg0: i32, %arg1: i32) -> (i32, i32) {
    %c0_i32 = arith.constant 0 : i32
    %c0_i32_0 = arith.constant 0 : i32
    %c0_i32_1 = arith.constant 0 : i32
    return %c0_i32, %c0_i32_0 : i32, i32
  }
  func.func @transform_14(%arg0: i32, %arg1: i32) -> (i32, i32) {
    %c0_i32 = arith.constant 0 : i32
    %c0_i32_0 = arith.constant 0 : i32
    %c0_i32_1 = arith.constant 0 : i32
    return %c0_i32, %c0_i32_0 : i32, i32
  }
  func.func @transform_15(%arg0: i32, %arg1: i32) -> (i32, i32) {
    %c0_i32 = arith.constant 0 : i32
    %c0_i32_0 = arith.constant 0 : i32
    %c0_i32_1 = arith.constant 0 : i32
    return %c0_i32, %c0_i32_0 : i32, i32
  }
  func.func @transform_16(%arg0: i32, %arg1: i32) -> (i32, i32) {
    %c0_i32 = arith.constant 0 : i32
    %c0_i32_0 = arith.constant 0 : i32
    %c0_i32_1 = arith.constant 0 : i32
    return %c0_i32, %c0_i32_0 : i32, i32
  }
  func.func @transform_17(%arg0: i32, %arg1: i32) -> (i32, i32) {
    %c0_i32 = arith.constant 0 : i32
    %c0_i32_0 = arith.constant 0 : i32
    %c0_i32_1 = arith.constant 0 : i32
    return %c0_i32, %c0_i32_0 : i32, i32
  }
  func.func @transform_18(%arg0: i32, %arg1: i32) -> (i32, i32, i32) {
    %c0_i32 = arith.constant 0 : i32
    %c0_i32_0 = arith.constant 0 : i32
    %c0_i32_1 = arith.constant 0 : i32
    return %arg0, %c0_i32, %c0_i32_0 : i32, i32, i32
  }
}

</mosaic_0001>

<llo_original>
// kernel: tpu_custom_call.1
$region0: #{tpu_custom_call.1}
  #allocation0 [shape = 'u32[]', space=smem, size = 0x4, offset = 0x4, fixed_abs, tag = 'smem constant byte address 0x4 - core index']
  #allocation1 [shape = 'u32[144,128]{1,0:T(1,128)}', space=vmem, size = 0x12000, scoped, tag = 'internal scratch']
  #allocation2 [shape = 'f32[2,8,32]{2,1,0:T(8,128)}', space=vmem, size = 0x2000, scoped, tag = 'scratch operand']
  %s0 = inlined_call_operand.vmem [shape: f32[2,8,32], index: 0, kind: input, shape index: {}]
  %s1 = inlined_call_operand.vmem [shape: f32[2,1,8], index: 1, kind: input, shape index: {}]
  %s2 = inlined_call_operand.vmem [shape: bf16[32,32], index: 2, kind: input, shape index: {}]
  %s3 = inlined_call_operand.hbm [shape: f32[1,32], index: 3, kind: input, shape index: {}]
  %s4 = inlined_call_operand.vmem [shape: bf16[32,32], index: 4, kind: input, shape index: {}]
  %s5 = inlined_call_operand.hbm [shape: f32[1,32], index: 5, kind: input, shape index: {}]
  %s6 = inlined_call_operand.hbm [shape: bf16[32,32], index: 6, kind: input, shape index: {}]
  %s7 = inlined_call_operand.hbm [shape: f32[1,32], index: 7, kind: input, shape index: {}]
  %s8 = inlined_call_operand.hbm [shape: bf16[32,32], index: 8, kind: input, shape index: {}]
  %s9 = inlined_call_operand.hbm [shape: f32[1,32], index: 9, kind: input, shape index: {}]
  %s10 = inlined_call_operand.vmem [shape: f32[1,32], index: 10, kind: input, shape index: {}]
  %s11 = inlined_call_operand.vmem [shape: f32[1,32], index: 11, kind: input, shape index: {}]
  %s12 = inlined_call_operand.vmem [shape: bf16[32,64], index: 12, kind: input, shape index: {}]
  %s13 = inlined_call_operand.vmem [shape: f32[1,64], index: 13, kind: input, shape index: {}]
  %s14 = inlined_call_operand.vmem [shape: bf16[64,32], index: 14, kind: input, shape index: {}]
  %s15 = inlined_call_operand.vmem [shape: f32[1,32], index: 15, kind: input, shape index: {}]
  %s16 = inlined_call_operand.vmem [shape: f32[1,32], index: 16, kind: input, shape index: {}]
  %s17 = inlined_call_operand.vmem [shape: f32[1,32], index: 17, kind: input, shape index: {}]
  %s18 = inlined_call_operand.hbm [shape: f32[2,8,32], index: 18, kind: output, shape index: {}]
  %s19 = sld [smem:[#allocation0]]
  $region137: #{tpu_custom_call.1} parent=0
    _
  %s21 = ssub.s32 1, %s19
  %s22 = scalar_select 0, %s21, %s19
  $region1: #{tpu_custom_call.1} parent=0
    #allocation3 [shape = 'u8[512]{0}', space=vmem, size = 0x400, scoped, tag = 'input window, operand 3, single buffered']
    #allocation4 [shape = 's32[2]{0}', space=sflag, size = 0x8, scoped, tag = 'scoped memory for tpu_custom_call.1']
    #allocation5 [shape = 's32[2]{0}', space=sflag, size = 0x8, scoped, tag = 'scoped memory for tpu_custom_call.1']
    #allocation6 [shape = 'u8[512]{0}', space=vmem, size = 0x400, scoped, tag = 'input window, operand 5, single buffered']
    #allocation7 [shape = 's32[1]{0}', space=sflag, size = 0x4, scoped, tag = 'scoped memory for tpu_custom_call.1']
    #allocation8 [shape = 'u8[8192]{0}', space=vmem, size = 0x2000, scoped, tag = 'input window, operand 6, single buffered']
    #allocation9 [shape = 'u8[512]{0}', space=vmem, size = 0x400, scoped, tag = 'input window, operand 7, single buffered']
    #allocation10 [shape = 's32[1]{0}', space=sflag, size = 0x4, scoped, tag = 'scoped memory for tpu_custom_call.1']
    #allocation11 [shape = 'u8[8192]{0}', space=vmem, size = 0x2000, scoped, tag = 'input window, operand 8, single buffered']
    #allocation12 [shape = 'u8[512]{0}', space=vmem, size = 0x400, scoped, tag = 'input window, operand 9, single buffered']
    #allocation13 [shape = 's32[1]{0}', space=sflag, size = 0x4, scoped, tag = 'scoped memory for tpu_custom_call.1']
    #allocation14 [shape = 'u8[8192]{0}', space=vmem, size = 0x2000, scoped, tag = 'output window, operand 0, single buffered']
    %23 = vsyncpa [#allocation4], 0
    %24 = vsyncpa [#allocation7], 0
    %25 = vsyncpa [#allocation10], 0
    %26 = vsyncpa [#allocation13], 0
    %27 = vsyncpa [#allocation5], 0
    loop: start=0, step=1, limit=5
    $region2: #{tpu_custom_call.1} parent=1 // loop_pre_header
      _
    $region3: #{tpu_custom_call.1} parent=1 // loop_header
      %s29 = sphi 0, %s33
      %p30 = scmp.ge.s32.totalorder %s29, 5
      %s36 = sphi 0, %s48
      %s37 = sphi 0, %s44
      %s38 = sphi 0, %s36
      %s39 = sphi 0, %s37
      %s40 = sphi 0, %s38
      %s41 = sphi 0, %s39
      %s51 = sphi 0, %s53
      %s54 = sphi 0, %s51
      %s55 = sphi 0, %s54
      %s71 = sphi 0, %s55
      %s77 = sphi 0, %s79
      %s80 = sphi 0, %s77
      %s81 = sphi 0, %s80
      %s97 = sphi 0, %s81
      %s101 = sphi 0, %s101
      %s103 = sphi 0, %s101
      %s104 = sphi 0, %s103
      %s118 = sphi 0, %s104
      %s122 = sphi 0, %s122
      %s124 = sphi 0, %s122
      %s125 = sphi 0, %s124
      %s139 = sphi 0, %s125
      %s143 = sphi 0, %s143
      %s145 = sphi 0, %s143
      %s146 = sphi 0, %s145
      %s160 = sphi 0, %s146
      %s164 = sphi 0, %s164
      %s166 = sphi 0, %s164
      %s167 = sphi 0, %s166
      %s181 = sphi 0, %s167
      %s185 = sphi 0, %s185
      %s187 = sphi 0, %s185
      %s188 = sphi 0, %s187
      %s202 = sphi 0, %s188
      %s206 = sphi 0, %s206
      %s208 = sphi 0, %s206
      %s209 = sphi 0, %s208
      %s223 = sphi 0, %s209
      %s227 = sphi 0, %s227
      %s229 = sphi 0, %s227
      %s230 = sphi 0, %s229
      %s244 = sphi 0, %s230
      %s248 = sphi 0, %s248
      %s250 = sphi 0, %s248
      %s251 = sphi 0, %s250
      %s265 = sphi 0, %s251
      %s269 = sphi 0, %s269
      %s271 = sphi 0, %s269
      %s272 = sphi 0, %s271
      %s286 = sphi 0, %s272
      %s290 = sphi 0, %s290
      %s292 = sphi 0, %s290
      %s293 = sphi 0, %s292
      %s307 = sphi 0, %s293
      %s311 = sphi 0, %s311
      %s313 = sphi 0, %s311
      %s314 = sphi 0, %s313
      %s328 = sphi 0, %s314
      %s332 = sphi 0, %s332
      %s334 = sphi 0, %s332
      %s335 = sphi 0, %s334
      %s349 = sphi 0, %s335
      %s353 = sphi 0, %s353
      %s355 = sphi 0, %s353
      %s356 = sphi 0, %s355
      %s370 = sphi 0, %s356
      %s374 = sphi 0, %s374
      %s376 = sphi 0, %s374
      %s377 = sphi 0, %s376
      %s391 = sphi 0, %s377
      %s395 = sphi 0, %s395
      %s397 = sphi 0, %s395
      %s398 = sphi 0, %s397
      %s412 = sphi 0, %s398
      %s416 = sphi 0, %s416
      %s418 = sphi 0, %s416
      %s419 = sphi 0, %s418
      %s433 = sphi 0, %s419
      %s439 = sphi 0, %s441
      %s442 = sphi 0, %s439
      %s443 = sphi 0, %s442
      %s459 = sphi 0, %s443
    $region4: #{tpu_custom_call.1} parent=1 // loop_header_branch
      %32 = sbr.rel (%p30) target = $region8
    $region5: #{tpu_custom_call.1} parent=1 // loop_body
      %s34 = ssub.s32 %s29, 1
      %s35 = ssub.s32 %s29, 2
      %s42 = sadd.s32 1, %s37
      %p43 = scmp.ge.s32.totalorder %s42, 3
      %s44 = scalar_select %p43, 0, %s42
      %s45 = sadd.s32 1, %s36
      %s46 = scalar_select %p43, %s45, %s36
      %p47 = scmp.ge.s32.totalorder %s46, 1
      %s48 = scalar_select %p47, 0, %s46
      %s49 = ssub.s32 %s36, %s48
      %p50 = scmp.eq.s32.totalorder %s49, 0
      %s52 = sadd.s32 %s51, 1
      %s53 = scalar_select %p50, %s51, %s52
      %p56 = pneg %p50
      %p57 = scmp.eq.s32.totalorder %s29, 2
      %p58 = por %p56, %p57
      %p59 = scmp.ne.s32.totalorder %s51, %s54
      %p60 = scmp.eq.s32.totalorder %s29, 0
      %p61 = por %p59, %p60
      %p62 = scmp.ne.s32.totalorder %s51, %s54
      %p63 = scmp.eq.s32.totalorder %s34, 2
      %p64 = por %p62, %p63
      %p65 = scmp.ne.s32.totalorder %s54, %s55
      %p66 = scmp.eq.s32.totalorder %s34, 0
      %p67 = por %p65, %p66
      %p68 = scmp.ne.s32.totalorder %s54, %s55
      %p69 = scmp.eq.s32.totalorder %s35, 2
      %p70 = por %p68, %p69
      %p72 = scmp.ne.s32.totalorder %s55, %s71
      %p73 = scmp.eq.s32.totalorder %s35, 0
      %p74 = por %p72, %p73
      %s75 = ssub.s32 %s36, %s48
      %p76 = scmp.eq.s32.totalorder %s75, 0
      %s78 = sadd.s32 %s77, 1
      %s79 = scalar_select %p76, %s77, %s78
      %p82 = pneg %p76
      %p83 = scmp.eq.s32.totalorder %s29, 2
      %p84 = por %p82, %p83
      %p85 = scmp.ne.s32.totalorder %s77, %s80
      %p86 = scmp.eq.s32.totalorder %s29, 0
      %p87 = por %p85, %p86
      %p88 = scmp.ne.s32.totalorder %s77, %s80
      %p89 = scmp.eq.s32.totalorder %s34, 2
      %p90 = por %p88, %p89
      %p91 = scmp.ne.s32.totalorder %s80, %s81
      %p92 = scmp.eq.s32.totalorder %s34, 0
      %p93 = por %p91, %p92
      %p94 = scmp.ne.s32.totalorder %s80, %s81
      %p95 = scmp.eq.s32.totalorder %s35, 2
      %p96 = por %p94, %p95
      %p98 = scmp.ne.s32.totalorder %s81, %s97
      %p99 = scmp.eq.s32.totalorder %s35, 0
      %p100 = por %p98, %p99
      %s102 = sadd.s32 %s101, 1
      %p105 = scmp.eq.s32.totalorder %s29, 2
      %p106 = scmp.ne.s32.totalorder %s101, %s103
      %p107 = scmp.eq.s32.totalorder %s29, 0
      %p108 = por %p106, %p107
      %p109 = scmp.ne.s32.totalorder %s101, %s103
      %p110 = scmp.eq.s32.totalorder %s34, 2
      %p111 = por %p109, %p110
      %p112 = scmp.ne.s32.totalorder %s103, %s104
      %p113 = scmp.eq.s32.totalorder %s34, 0
      %p114 = por %p112, %p113
      %p115 = scmp.ne.s32.totalorder %s103, %s104
      %p116 = scmp.eq.s32.totalorder %s35, 2
      %p117 = por %p115, %p116
      %p119 = scmp.ne.s32.totalorder %s104, %s118
      %p120 = scmp.eq.s32.totalorder %s35, 0
      %p121 = por %p119, %p120
      %s123 = sadd.s32 %s122, 1
      %p126 = scmp.eq.s32.totalorder %s29, 2
      %p127 = scmp.ne.s32.totalorder %s122, %s124
      %p128 = scmp.eq.s32.totalorder %s29, 0
      %p129 = por %p127, %p128
      %p130 = scmp.ne.s32.totalorder %s122, %s124
      %p131 = scmp.eq.s32.totalorder %s34, 2
      %p132 = por %p130, %p131
      %p133 = scmp.ne.s32.totalorder %s124, %s125
      %p134 = scmp.eq.s32.totalorder %s34, 0
      %p135 = por %p133, %p134
      %p136 = scmp.ne.s32.totalorder %s124, %s125
      %p137 = scmp.eq.s32.totalorder %s35, 2
      %p138 = por %p136, %p137
      %p140 = scmp.ne.s32.totalorder %s125, %s139
      %p141 = scmp.eq.s32.totalorder %s35, 0
      %p142 = por %p140, %p141
      %s144 = sadd.s32 %s143, 1
      %p147 = scmp.eq.s32.totalorder %s29, 2
      %p148 = scmp.ne.s32.totalorder %s143, %s145
      %p149 = scmp.eq.s32.totalorder %s29, 0
      %p150 = por %p148, %p149
      %p151 = scmp.ne.s32.totalorder %s143, %s145
      %p152 = scmp.eq.s32.totalorder %s34, 2
      %p153 = por %p151, %p152
      %p154 = scmp.ne.s32.totalorder %s145, %s146
      %p155 = scmp.eq.s32.totalorder %s34, 0
      %p156 = por %p154, %p155
      %p157 = scmp.ne.s32.totalorder %s145, %s146
      %p158 = scmp.eq.s32.totalorder %s35, 2
      %p159 = por %p157, %p158
      %p161 = scmp.ne.s32.totalorder %s146, %s160
      %p162 = scmp.eq.s32.totalorder %s35, 0
      %p163 = por %p161, %p162
      %s165 = sadd.s32 %s164, 1
      %p168 = scmp.eq.s32.totalorder %s29, 2
      %p169 = scmp.ne.s32.totalorder %s164, %s166
      %p170 = scmp.eq.s32.totalorder %s29, 0
      %p171 = por %p169, %p170
      %p172 = scmp.ne.s32.totalorder %s164, %s166
      %p173 = scmp.eq.s32.totalorder %s34, 2
      %p174 = por %p172, %p173
      %p175 = scmp.ne.s32.totalorder %s166, %s167
      %p176 = scmp.eq.s32.totalorder %s34, 0
      %p177 = por %p175, %p176
      %p178 = scmp.ne.s32.totalorder %s166, %s167
      %p179 = scmp.eq.s32.totalorder %s35, 2
      %p180 = por %p178, %p179
      %p182 = scmp.ne.s32.totalorder %s167, %s181
      %p183 = scmp.eq.s32.totalorder %s35, 0
      %p184 = por %p182, %p183
      %s186 = sadd.s32 %s185, 1
      %p189 = scmp.eq.s32.totalorder %s29, 2
      %p190 = scmp.ne.s32.totalorder %s185, %s187
      %p191 = scmp.eq.s32.totalorder %s29, 0
      %p192 = por %p190, %p191
      %p193 = scmp.ne.s32.totalorder %s185, %s187
      %p194 = scmp.eq.s32.totalorder %s34, 2
      %p195 = por %p193, %p194
      %p196 = scmp.ne.s32.totalorder %s187, %s188
      %p197 = scmp.eq.s32.totalorder %s34, 0
      %p198 = por %p196, %p197
      %p199 = scmp.ne.s32.totalorder %s187, %s188
      %p200 = scmp.eq.s32.totalorder %s35, 2
      %p201 = por %p199, %p200
      %p203 = scmp.ne.s32.totalorder %s188, %s202
      %p204 = scmp.eq.s32.totalorder %s35, 0
      %p205 = por %p203, %p204
      %s207 = sadd.s32 %s206, 1
      %p210 = scmp.eq.s32.totalorder %s29, 2
      %p211 = scmp.ne.s32.totalorder %s206, %s208
      %p212 = scmp.eq.s32.totalorder %s29, 0
      %p213 = por %p211, %p212
      %p214 = scmp.ne.s32.totalorder %s206, %s208
      %p215 = scmp.eq.s32.totalorder %s34, 2
      %p216 = por %p214, %p215
      %p217 = scmp.ne.s32.totalorder %s208, %s209
      %p218 = scmp.eq.s32.totalorder %s34, 0
      %p219 = por %p217, %p218
      %p220 = scmp.ne.s32.totalorder %s208, %s209
      %p221 = scmp.eq.s32.totalorder %s35, 2
      %p222 = por %p220, %p221
      %p224 = scmp.ne.s32.totalorder %s209, %s223
      %p225 = scmp.eq.s32.totalorder %s35, 0
      %p226 = por %p224, %p225
      %s228 = sadd.s32 %s227, 1
      %p231 = scmp.eq.s32.totalorder %s29, 2
      %p232 = scmp.ne.s32.totalorder %s227, %s229
      %p233 = scmp.eq.s32.totalorder %s29, 0
      %p234 = por %p232, %p233
      %p235 = scmp.ne.s32.totalorder %s227, %s229
      %p236 = scmp.eq.s32.totalorder %s34, 2
      %p237 = por %p235, %p236
      %p238 = scmp.ne.s32.totalorder %s229, %s230
      %p239 = scmp.eq.s32.totalorder %s34, 0
      %p240 = por %p238, %p239
      %p241 = scmp.ne.s32.totalorder %s229, %s230
      %p242 = scmp.eq.s32.totalorder %s35, 2
      %p243 = por %p241, %p242
      %p245 = scmp.ne.s32.totalorder %s230, %s244
      %p246 = scmp.eq.s32.totalorder %s35, 0
      %p247 = por %p245, %p246
      %s249 = sadd.s32 %s248, 1
      %p252 = scmp.eq.s32.totalorder %s29, 2
      %p253 = scmp.ne.s32.totalorder %s248, %s250
      %p254 = scmp.eq.s32.totalorder %s29, 0
      %p255 = por %p253, %p254
      %p256 = scmp.ne.s32.totalorder %s248, %s250
      %p257 = scmp.eq.s32.totalorder %s34, 2
      %p258 = por %p256, %p257
      %p259 = scmp.ne.s32.totalorder %s250, %s251
      %p260 = scmp.eq.s32.totalorder %s34, 0
      %p261 = por %p259, %p260
      %p262 = scmp.ne.s32.totalorder %s250, %s251
      %p263 = scmp.eq.s32.totalorder %s35, 2
      %p264 = por %p262, %p263
      %p266 = scmp.ne.s32.totalorder %s251, %s265
      %p267 = scmp.eq.s32.totalorder %s35, 0
      %p268 = por %p266, %p267
      %s270 = sadd.s32 %s269, 1
      %p273 = scmp.eq.s32.totalorder %s29, 2
      %p274 = scmp.ne.s32.totalorder %s269, %s271
      %p275 = scmp.eq.s32.totalorder %s29, 0
      %p276 = por %p274, %p275
      %p277 = scmp.ne.s32.totalorder %s269, %s271
      %p278 = scmp.eq.s32.totalorder %s34, 2
      %p279 = por %p277, %p278
      %p280 = scmp.ne.s32.totalorder %s271, %s272
      %p281 = scmp.eq.s32.totalorder %s34, 0
      %p282 = por %p280, %p281
      %p283 = scmp.ne.s32.totalorder %s271, %s272
      %p284 = scmp.eq.s32.totalorder %s35, 2
      %p285 = por %p283, %p284
      %p287 = scmp.ne.s32.totalorder %s272, %s286
      %p288 = scmp.eq.s32.totalorder %s35, 0
      %p289 = por %p287, %p288
      %s291 = sadd.s32 %s290, 1
      %p294 = scmp.eq.s32.totalorder %s29, 2
      %p295 = scmp.ne.s32.totalorder %s290, %s292
      %p296 = scmp.eq.s32.totalorder %s29, 0
      %p297 = por %p295, %p296
      %p298 = scmp.ne.s32.totalorder %s290, %s292
      %p299 = scmp.eq.s32.totalorder %s34, 2
      %p300 = por %p298, %p299
      %p301 = scmp.ne.s32.totalorder %s292, %s293
      %p302 = scmp.eq.s32.totalorder %s34, 0
      %p303 = por %p301, %p302
      %p304 = scmp.ne.s32.totalorder %s292, %s293
      %p305 = scmp.eq.s32.totalorder %s35, 2
      %p306 = por %p304, %p305
      %p308 = scmp.ne.s32.totalorder %s293, %s307
      %p309 = scmp.eq.s32.totalorder %s35, 0
      %p310 = por %p308, %p309
      %s312 = sadd.s32 %s311, 1
      %p315 = scmp.eq.s32.totalorder %s29, 2
      %p316 = scmp.ne.s32.totalorder %s311, %s313
      %p317 = scmp.eq.s32.totalorder %s29, 0
      %p318 = por %p316, %p317
      %p319 = scmp.ne.s32.totalorder %s311, %s313
      %p320 = scmp.eq.s32.totalorder %s34, 2
      %p321 = por %p319, %p320
      %p322 = scmp.ne.s32.totalorder %s313, %s314
      %p323 = scmp.eq.s32.totalorder %s34, 0
      %p324 = por %p322, %p323
      %p325 = scmp.ne.s32.totalorder %s313, %s314
      %p326 = scmp.eq.s32.totalorder %s35, 2
      %p327 = por %p325, %p326
      %p329 = scmp.ne.s32.totalorder %s314, %s328
      %p330 = scmp.eq.s32.totalorder %s35, 0
      %p331 = por %p329, %p330
      %s333 = sadd.s32 %s332, 1
      %p336 = scmp.eq.s32.totalorder %s29, 2
      %p337 = scmp.ne.s32.totalorder %s332, %s334
      %p338 = scmp.eq.s32.totalorder %s29, 0
      %p339 = por %p337, %p338
      %p340 = scmp.ne.s32.totalorder %s332, %s334
      %p341 = scmp.eq.s32.totalorder %s34, 2
      %p342 = por %p340, %p341
      %p343 = scmp.ne.s32.totalorder %s334, %s335
      %p344 = scmp.eq.s32.totalorder %s34, 0
      %p345 = por %p343, %p344
      %p346 = scmp.ne.s32.totalorder %s334, %s335
      %p347 = scmp.eq.s32.totalorder %s35, 2
      %p348 = por %p346, %p347
      %p350 = scmp.ne.s32.totalorder %s335, %s349
      %p351 = scmp.eq.s32.totalorder %s35, 0
      %p352 = por %p350, %p351
      %s354 = sadd.s32 %s353, 1
      %p357 = scmp.eq.s32.totalorder %s29, 2
      %p358 = scmp.ne.s32.totalorder %s353, %s355
      %p359 = scmp.eq.s32.totalorder %s29, 0
      %p360 = por %p358, %p359
      %p361 = scmp.ne.s32.totalorder %s353, %s355
      %p362 = scmp.eq.s32.totalorder %s34, 2
      %p363 = por %p361, %p362
      %p364 = scmp.ne.s32.totalorder %s355, %s356
      %p365 = scmp.eq.s32.totalorder %s34, 0
      %p366 = por %p364, %p365
      %p367 = scmp.ne.s32.totalorder %s355, %s356
      %p368 = scmp.eq.s32.totalorder %s35, 2
      %p369 = por %p367, %p368
      %p371 = scmp.ne.s32.totalorder %s356, %s370
      %p372 = scmp.eq.s32.totalorder %s35, 0
      %p373 = por %p371, %p372
      %s375 = sadd.s32 %s374, 1
      %p378 = scmp.eq.s32.totalorder %s29, 2
      %p379 = scmp.ne.s32.totalorder %s374, %s376
      %p380 = scmp.eq.s32.totalorder %s29, 0
      %p381 = por %p379, %p380
      %p382 = scmp.ne.s32.totalorder %s374, %s376
      %p383 = scmp.eq.s32.totalorder %s34, 2
      %p384 = por %p382, %p383
      %p385 = scmp.ne.s32.totalorder %s376, %s377
      %p386 = scmp.eq.s32.totalorder %s34, 0
      %p387 = por %p385, %p386
      %p388 = scmp.ne.s32.totalorder %s376, %s377
      %p389 = scmp.eq.s32.totalorder %s35, 2
      %p390 = por %p388, %p389
      %p392 = scmp.ne.s32.totalorder %s377, %s391
      %p393 = scmp.eq.s32.totalorder %s35, 0
      %p394 = por %p392, %p393
      %s396 = sadd.s32 %s395, 1
      %p399 = scmp.eq.s32.totalorder %s29, 2
      %p400 = scmp.ne.s32.totalorder %s395, %s397
      %p401 = scmp.eq.s32.totalorder %s29, 0
      %p402 = por %p400, %p401
      %p403 = scmp.ne.s32.totalorder %s395, %s397
      %p404 = scmp.eq.s32.totalorder %s34, 2
      %p405 = por %p403, %p404
      %p406 = scmp.ne.s32.totalorder %s397, %s398
      %p407 = scmp.eq.s32.totalorder %s34, 0
      %p408 = por %p406, %p407
      %p409 = scmp.ne.s32.totalorder %s397, %s398
      %p410 = scmp.eq.s32.totalorder %s35, 2
      %p411 = por %p409, %p410
      %p413 = scmp.ne.s32.totalorder %s398, %s412
      %p414 = scmp.eq.s32.totalorder %s35, 0
      %p415 = por %p413, %p414
      %s417 = sadd.s32 %s416, 1
      %p420 = scmp.eq.s32.totalorder %s29, 2
      %p421 = scmp.ne.s32.totalorder %s416, %s418
      %p422 = scmp.eq.s32.totalorder %s29, 0
      %p423 = por %p421, %p422
      %p424 = scmp.ne.s32.totalorder %s416, %s418
      %p425 = scmp.eq.s32.totalorder %s34, 2
      %p426 = por %p424, %p425
      %p427 = scmp.ne.s32.totalorder %s418, %s419
      %p428 = scmp.eq.s32.totalorder %s34, 0
      %p429 = por %p427, %p428
      %p430 = scmp.ne.s32.totalorder %s418, %s419
      %p431 = scmp.eq.s32.totalorder %s35, 2
      %p432 = por %p430, %p431
      %p434 = scmp.ne.s32.totalorder %s419, %s433
      %p435 = scmp.eq.s32.totalorder %s35, 0
      %p436 = por %p434, %p435
      %s437 = ssub.s32 %s36, %s48
      %p438 = scmp.eq.s32.totalorder %s437, 0
      %s440 = sadd.s32 %s439, 1
      %s441 = scalar_select %p438, %s439, %s440
      %p444 = pneg %p438
      %p445 = scmp.eq.s32.totalorder %s29, 2
      %p446 = por %p444, %p445
      %p447 = scmp.ne.s32.totalorder %s439, %s442
      %p448 = scmp.eq.s32.totalorder %s29, 0
      %p449 = por %p447, %p448
      %p450 = scmp.ne.s32.totalorder %s439, %s442
      %p451 = scmp.eq.s32.totalorder %s34, 2
      %p452 = por %p450, %p451
      %p453 = scmp.ne.s32.totalorder %s442, %s443
      %p454 = scmp.eq.s32.totalorder %s34, 0
      %p455 = por %p453, %p454
      %p456 = scmp.ne.s32.totalorder %s442, %s443
      %p457 = scmp.eq.s32.totalorder %s35, 2
      %p458 = por %p456, %p457
      %p460 = scmp.ne.s32.totalorder %s443, %s459
      %p461 = scmp.eq.s32.totalorder %s35, 0
      %p462 = por %p460, %p461
      %p463 = scmp.le.s32.totalorder 1, %s29
      %p464 = scmp.lt.s32.totalorder %s29, 4
      %p465 = pnand %p463, %p464
      %p466 = pneg %p465
      // Predicated region
      $region9: #{tpu_custom_call.1} parent=5 // pred_check
        _
      $region10: #{tpu_custom_call.1} parent=5 // pred_check_branch
        %468 = sbr.rel (%p465) target = $region12
      $region11: #{tpu_custom_call.1} parent=5 // pred_region
        %s469 = ssub.s32 %s29, 1
        // Predicated region
        $region13: #{tpu_custom_call.1} parent=11 // pred_check
          %p470 = pneg %p67
        $region14: #{tpu_custom_call.1} parent=11 // pred_check_branch
          %472 = sbr.rel (%p470) target = $region16
        $region15: #{tpu_custom_call.1} parent=11 // pred_region
          %s473 = smul.u32 2, %s38
          %p474 = scmp.lt.s32.totalorder %s473, 1
          %s475 = scalar_select %p474, %s473, 1
          %s476 = smul.addr %s475, 8
          %s477 = scalar_lea.vmem %s0, %s476
          %s478 = smul.u32 2, %s38
        $region16: #{tpu_custom_call.1} parent=11 // pred_fallthru
          _
        // Predicated region
        $region17: #{tpu_custom_call.1} parent=11 // pred_check
          %p479 = pneg %p93
        $region18: #{tpu_custom_call.1} parent=11 // pred_check_branch
          %481 = sbr.rel (%p479) target = $region20
        $region19: #{tpu_custom_call.1} parent=11 // pred_region
          %s482 = smul.u32 2, %s38
          %p483 = scmp.lt.s32.totalorder %s482, 1
          %s484 = scalar_select %p483, %s482, 1
          %s485 = scalar_lea.vmem %s1, %s484
          %s486 = smul.u32 2, %s38
        $region20: #{tpu_custom_call.1} parent=11 // pred_fallthru
          _
        // Predicated region
        $region21: #{tpu_custom_call.1} parent=11 // pred_check
          %p487 = pneg %p114
        $region22: #{tpu_custom_call.1} parent=11 // pred_check_branch
          %489 = sbr.rel (%p487) target = $region24
        $region23: #{tpu_custom_call.1} parent=11 // pred_region
          _
        $region24: #{tpu_custom_call.1} parent=11 // pred_fallthru
          _
        // Predicated region
        $region25: #{tpu_custom_call.1} parent=11 // pred_check
          %p490 = pneg %p135
        $region26: #{tpu_custom_call.1} parent=11 // pred_check_branch
          %492 = sbr.rel (%p490) target = $region28
        $region27: #{tpu_custom_call.1} parent=11 // pred_region
          %s494 = ssub.s32 16, 16
          %495 = vsyncadd [#allocation4], %s494
          %s497 = sshll.u32 [#allocation3], 4
          %s498 = int_to_ptr.vmem [resolvable:$true] %s497
          %500 = dma.hbm_to_vmem [thread:$0]  %s3, 16, %s498, [#allocation4]
        $region28: #{tpu_custom_call.1} parent=11 // pred_fallthru
          _
        // Predicated region
        $region29: #{tpu_custom_call.1} parent=11 // pred_check
          %p501 = pneg %p156
        $region30: #{tpu_custom_call.1} parent=11 // pred_check_branch
          %503 = sbr.rel (%p501) target = $region32
        $region31: #{tpu_custom_call.1} parent=11 // pred_region
          _
        $region32: #{tpu_custom_call.1} parent=11 // pred_fallthru
          _
        // Predicated region
        $region33: #{tpu_custom_call.1} parent=11 // pred_check
          %p504 = pneg %p177
        $region34: #{tpu_custom_call.1} parent=11 // pred_check_branch
          %506 = sbr.rel (%p504) target = $region36
        $region35: #{tpu_custom_call.1} parent=11 // pred_region
          %s508 = ssub.s32 16, 16
          %509 = vsyncadd [#allocation7], %s508
          %s511 = sshll.u32 [#allocation6], 4
          %s512 = int_to_ptr.vmem [resolvable:$true] %s511
          %514 = dma.hbm_to_vmem [thread:$0]  %s5, 16, %s512, [#allocation7]
        $region36: #{tpu_custom_call.1} parent=11 // pred_fallthru
          _
        // Predicated region
        $region37: #{tpu_custom_call.1} parent=11 // pred_check
          %p515 = pneg %p198
        $region38: #{tpu_custom_call.1} parent=11 // pred_check_branch
          %517 = sbr.rel (%p515) target = $region40
        $region39: #{tpu_custom_call.1} parent=11 // pred_region
          %s519 = ssub.s32 256, 256
          %520 = vsyncadd [#allocation7], %s519
          %s521 = sshll.u32 [#allocation8], 4
          %s522 = int_to_ptr.vmem [resolvable:$true] %s521
          %527 = dma.hbm_to_vmem [thread:$0]  %s6, 256, %s522, [#allocation7], 64, 64, 4
        $region40: #{tpu_custom_call.1} parent=11 // pred_fallthru
          _
        // Predicated region
        $region41: #{tpu_custom_call.1} parent=11 // pred_check
          %p528 = pneg %p219
        $region42: #{tpu_custom_call.1} parent=11 // pred_check_branch
          %530 = sbr.rel (%p528) target = $region44
        $region43: #{tpu_custom_call.1} parent=11 // pred_region
          %s532 = ssub.s32 16, 16
          %533 = vsyncadd [#allocation10], %s532
          %s535 = sshll.u32 [#allocation9], 4
          %s536 = int_to_ptr.vmem [resolvable:$true] %s535
          %538 = dma.hbm_to_vmem [thread:$0]  %s7, 16, %s536, [#allocation10]
        $region44: #{tpu_custom_call.1} parent=11 // pred_fallthru
          _
        // Predicated region
        $region45: #{tpu_custom_call.1} parent=11 // pred_check
          %p539 = pneg %p240
        $region46: #{tpu_custom_call.1} parent=11 // pred_check_branch
          %541 = sbr.rel (%p539) target = $region48
        $region47: #{tpu_custom_call.1} parent=11 // pred_region
          %s543 = ssub.s32 256, 256
          %544 = vsyncadd [#allocation10], %s543
          %s545 = sshll.u32 [#allocation11], 4
          %s546 = int_to_ptr.vmem [resolvable:$true] %s545
          %551 = dma.hbm_to_vmem [thread:$0]  %s8, 256, %s546, [#allocation10], 64, 64, 4
        $region48: #{tpu_custom_call.1} parent=11 // pred_fallthru
          _
        // Predicated region
        $region49: #{tpu_custom_call.1} parent=11 // pred_check
          %p552 = pneg %p261
        $region50: #{tpu_custom_call.1} parent=11 // pred_check_branch
          %554 = sbr.rel (%p552) target = $region52
        $region51: #{tpu_custom_call.1} parent=11 // pred_region
          %s556 = ssub.s32 16, 16
          %557 = vsyncadd [#allocation13], %s556
          %s559 = sshll.u32 [#allocation12], 4
          %s560 = int_to_ptr.vmem [resolvable:$true] %s559
          %562 = dma.hbm_to_vmem [thread:$0]  %s9, 16, %s560, [#allocation13]
        $region52: #{tpu_custom_call.1} parent=11 // pred_fallthru
          _
        // Predicated region
        $region53: #{tpu_custom_call.1} parent=11 // pred_check
          %p563 = pneg %p282
        $region54: #{tpu_custom_call.1} parent=11 // pred_check_branch
          %565 = sbr.rel (%p563) target = $region56
        $region55: #{tpu_custom_call.1} parent=11 // pred_region
          _
        $region56: #{tpu_custom_call.1} parent=11 // pred_fallthru
          _
        // Predicated region
        $region57: #{tpu_custom_call.1} parent=11 // pred_check
          %p566 = pneg %p303
        $region58: #{tpu_custom_call.1} parent=11 // pred_check_branch
          %568 = sbr.rel (%p566) target = $region60
        $region59: #{tpu_custom_call.1} parent=11 // pred_region
          _
        $region60: #{tpu_custom_call.1} parent=11 // pred_fallthru
          _
        // Predicated region
        $region61: #{tpu_custom_call.1} parent=11 // pred_check
          %p569 = pneg %p324
        $region62: #{tpu_custom_call.1} parent=11 // pred_check_branch
          %571 = sbr.rel (%p569) target = $region64
        $region63: #{tpu_custom_call.1} parent=11 // pred_region
          _
        $region64: #{tpu_custom_call.1} parent=11 // pred_fallthru
          _
        // Predicated region
        $region65: #{tpu_custom_call.1} parent=11 // pred_check
          %p572 = pneg %p345
        $region66: #{tpu_custom_call.1} parent=11 // pred_check_branch
          %574 = sbr.rel (%p572) target = $region68
        $region67: #{tpu_custom_call.1} parent=11 // pred_region
          _
        $region68: #{tpu_custom_call.1} parent=11 // pred_fallthru
          _
        // Predicated region
        $region69: #{tpu_custom_call.1} parent=11 // pred_check
          %p575 = pneg %p366
        $region70: #{tpu_custom_call.1} parent=11 // pred_check_branch
          %577 = sbr.rel (%p575) target = $region72
        $region71: #{tpu_custom_call.1} parent=11 // pred_region
          _
        $region72: #{tpu_custom_call.1} parent=11 // pred_fallthru
          _
        // Predicated region
        $region73: #{tpu_custom_call.1} parent=11 // pred_check
          %p578 = pneg %p387
        $region74: #{tpu_custom_call.1} parent=11 // pred_check_branch
          %580 = sbr.rel (%p578) target = $region76
        $region75: #{tpu_custom_call.1} parent=11 // pred_region
          _
        $region76: #{tpu_custom_call.1} parent=11 // pred_fallthru
          _
        // Predicated region
        $region77: #{tpu_custom_call.1} parent=11 // pred_check
          %p581 = pneg %p408
        $region78: #{tpu_custom_call.1} parent=11 // pred_check_branch
          %583 = sbr.rel (%p581) target = $region80
        $region79: #{tpu_custom_call.1} parent=11 // pred_region
          _
        $region80: #{tpu_custom_call.1} parent=11 // pred_fallthru
          _
        // Predicated region
        $region81: #{tpu_custom_call.1} parent=11 // pred_check
          %p584 = pneg %p429
        $region82: #{tpu_custom_call.1} parent=11 // pred_check_branch
          %586 = sbr.rel (%p584) target = $region84
        $region83: #{tpu_custom_call.1} parent=11 // pred_region
          _
        $region84: #{tpu_custom_call.1} parent=11 // pred_fallthru
          _
      $region12: #{tpu_custom_call.1} parent=5 // pred_fallthru
        _
      %p587 = scmp.lt.s32.totalorder %s29, 3
      // Predicated region
      $region85: #{tpu_custom_call.1} parent=5 // pred_check
        %p588 = pneg %p587
      $region86: #{tpu_custom_call.1} parent=5 // pred_check_branch
        %590 = sbr.rel (%p588) target = $region88
      $region87: #{tpu_custom_call.1} parent=5 // pred_region
        _
      $region88: #{tpu_custom_call.1} parent=5 // pred_fallthru
        _
      %p591 = scmp.le.s32.totalorder 1, %s29
      %p592 = scmp.lt.s32.totalorder %s29, 4
      %p593 = pnand %p591, %p592
      %p594 = pneg %p593
      // Predicated region
      $region89: #{tpu_custom_call.1} parent=5 // pred_check
        _
      $region90: #{tpu_custom_call.1} parent=5 // pred_check_branch
        %596 = sbr.rel (%p593) target = $region92
      $region91: #{tpu_custom_call.1} parent=5 // pred_region
        %s597 = ssub.s32 %s29, 1
        // Predicated region
        $region93: #{tpu_custom_call.1} parent=91 // pred_check
          %p598 = pneg %p135
        $region94: #{tpu_custom_call.1} parent=91 // pred_check_branch
          %600 = sbr.rel (%p598) target = $region96
        $region95: #{tpu_custom_call.1} parent=91 // pred_region
          %601 = dma.done [#allocation4], 16
        $region96: #{tpu_custom_call.1} parent=91 // pred_fallthru
          _
        // Predicated region
        $region97: #{tpu_custom_call.1} parent=91 // pred_check
          %p602 = pneg %p177
        $region98: #{tpu_custom_call.1} parent=91 // pred_check_branch
          %604 = sbr.rel (%p602) target = $region100
        $region99: #{tpu_custom_call.1} parent=91 // pred_region
          %605 = dma.done [#allocation7], 16
        $region100: #{tpu_custom_call.1} parent=91 // pred_fallthru
          _
        // Predicated region
        $region101: #{tpu_custom_call.1} parent=91 // pred_check
          %p606 = pneg %p198
        $region102: #{tpu_custom_call.1} parent=91 // pred_check_branch
          %608 = sbr.rel (%p606) target = $region104
        $region103: #{tpu_custom_call.1} parent=91 // pred_region
          %609 = dma.done [#allocation7], 256
        $region104: #{tpu_custom_call.1} parent=91 // pred_fallthru
          _
        // Predicated region
        $region105: #{tpu_custom_call.1} parent=91 // pred_check
          %p610 = pneg %p219
        $region106: #{tpu_custom_call.1} parent=91 // pred_check_branch
          %612 = sbr.rel (%p610) target = $region108
        $region107: #{tpu_custom_call.1} parent=91 // pred_region
          %613 = dma.done [#allocation10], 16
        $region108: #{tpu_custom_call.1} parent=91 // pred_fallthru
          _
        // Predicated region
        $region109: #{tpu_custom_call.1} parent=91 // pred_check
          %p614 = pneg %p240
        $region110: #{tpu_custom_call.1} parent=91 // pred_check_branch
          %616 = sbr.rel (%p614) target = $region112
        $region111: #{tpu_custom_call.1} parent=91 // pred_region
          %617 = dma.done [#allocation10], 256
        $region112: #{tpu_custom_call.1} parent=91 // pred_fallthru
          _
        // Predicated region
        $region113: #{tpu_custom_call.1} parent=91 // pred_check
          %p618 = pneg %p261
        $region114: #{tpu_custom_call.1} parent=91 // pred_check_branch
          %620 = sbr.rel (%p618) target = $region116
        $region115: #{tpu_custom_call.1} parent=91 // pred_region
          %621 = dma.done [#allocation13], 16
        $region116: #{tpu_custom_call.1} parent=91 // pred_fallthru
          _
        %s622 = smul.u32 2, %s38
        %p623 = scmp.lt.s32.totalorder %s622, 1
        %s624 = scalar_select %p623, %s622, 1
        %s625 = smul.addr %s624, 8
        %s626 = scalar_lea.vmem %s0, %s625
        %p627 = pneg %p67
        %p628 = pneg %p64
        %s629 = smul.u32 2, %s38
        %p630 = scmp.lt.s32.totalorder %s629, 1
        %s631 = scalar_select %p630, %s629, 1
        %s632 = scalar_lea.vmem %s1, %s631
        %p633 = pneg %p93
        %p634 = pneg %p90
        %p635 = pneg %p114
        %p636 = pneg %p111
        %p637 = pneg %p135
        %p638 = pneg %p132
        %p639 = pneg %p156
        %p640 = pneg %p153
        %p641 = pneg %p177
        %p642 = pneg %p174
        %p643 = pneg %p198
        %p644 = pneg %p195
        %p645 = pneg %p219
        %p646 = pneg %p216
        %p647 = pneg %p240
        %p648 = pneg %p237
        %p649 = pneg %p261
        %p650 = pneg %p258
        %p651 = pneg %p282
        %p652 = pneg %p279
        %p653 = pneg %p303
        %p654 = pneg %p300
        %p655 = pneg %p324
        %p656 = pneg %p321
        %p657 = pneg %p345
        %p658 = pneg %p342
        %p659 = pneg %p366
        %p660 = pneg %p363
        %p661 = pneg %p387
        %p662 = pneg %p384
        %p663 = pneg %p408
        %p664 = pneg %p405
        %p665 = pneg %p429
        %p666 = pneg %p426
        %p667 = pneg %p455
        %p668 = pneg %p452
        %s669 = smul.u32 2, %s38
        %p670 = scmp.lt.s32.totalorder %s669, 1
        %s671 = scalar_select %p670, %s669, 1
        %s672 = smul.addr %s671, 8
        %s673 = scalar_lea.vmem %s0, %s672
        %s674 = smul.u32 2, %s38
        %s675 = smul.u32 2, %s38
        %p676 = scmp.lt.s32.totalorder %s675, 1
        %s677 = scalar_select %p676, %s675, 1
        %s678 = scalar_lea.vmem %s1, %s677
        %s679 = smul.u32 2, %s38
        %s680 = smul.u32 2, %s38
        %p682 = scmp.eq.s32.totalorder %s39, 0
        // Predicated region
        $region117: #{tpu_custom_call.1} parent=91 // pred_check
          %p683 = pneg %p682
        $region118: #{tpu_custom_call.1} parent=91 // pred_check_branch
          %685 = sbr.rel (%p683) target = $region120
        $region119: #{tpu_custom_call.1} parent=91 // pred_region
          %v686 = vld [vmem:[%s673] sm:$0xff]
          %v687 = vld [vmem:[%s673 + $0x8] sm:$0xff]
          %vm688 = vcmask 261120
          %689 = vst.msk [vmem:[#allocation2] sm:$0xff] %vm688, %v686
          %690 = vst.msk [vmem:[#allocation2 + $0x8] sm:$0xff] %vm688, %v687
        $region120: #{tpu_custom_call.1} parent=91 // pred_fallthru
          _
        %v691 = vld [vmem:[#allocation2] sm:$0xff]
        %v692 = vld [vmem:[#allocation2 + $0x8] sm:$0xff]
        %v693 = vpack.c.bf16 %v692, %v691
        %v694 = vld [vmem:[%s678] sm:$0x1]
        %v695 = vld [vmem:[%s678 + $0x1] sm:$0x1]
        %v696 = vld [vmem:[%s2] sm:$0xf]
        %v697 = vld [vmem:[%s2 + $0x4] sm:$0xf]
        %v698 = vld [vmem:[%s2 + $0x8] sm:$0xf]
        %v699 = vld [vmem:[%s2 + $0xc] sm:$0xf]
        %v700 = vld [vmem:[#allocation3] sm:$0x1]
        %v702 = vlaneseq
        %v703 = vshrl.u32 %v702, 7
        %v704 = vsub.s32 0, %v703
        %v705 = vrot.slane %v700, %v704
        %v711 = vunpack.c.l.b16 %v696
        %v712 = vunpack.c.l.b16 %v697
        %v713 = vunpack.c.l.b16 %v698
        %v714 = vunpack.c.l.b16 %v699
        %v715 = vpack.c.b16 %v712, %v711
        %v716 = vpack.c.b16 %v714, %v713
        %vm719 = vcmask 261120
        %v721 = vsel %vm719, %v693, 0
        %723 = vmatprep.subr.bf16.mxu0 0
        %724 = vmatpush1.bf16.msra.mxu0 %v715
        %725 = vmatprep.subr.bf16.mxu0 0
        %726 = vmatpush1.bf16.msra.mxu0 %v716
        %727 = vmatprep.subr.bf16.mxu0 0
        %728 = vmatpush1.bf16.msra.mxu0 0
        %729 = vmatprep.subr.bf16.mxu0 0
        %730 = vmatpush1.bf16.msra.mxu0 0
        %731 = vmatprep.subr.bf16.mxu0 0
        %732 = vmatpush1.bf16.msra.mxu0 0
        %733 = vmatprep.subr.bf16.mxu0 0
        %734 = vmatpush1.bf16.msra.mxu0 0
        %735 = vmatprep.subr.bf16.mxu0 0
        %736 = vmatpush1.bf16.msra.mxu0 0
        %737 = vmatprep.subr.bf16.mxu0 0
        %738 = vmatpush1.bf16.msra.mxu0 0
        %739 = vmatprep.subr.bf16.mxu0 0
        %740 = vmatpush1.bf16.msra.mxu0 0
        %741 = vmatprep.subr.bf16.mxu0 0
        %742 = vmatpush1.bf16.msra.mxu0 0
        %743 = vmatprep.subr.bf16.mxu0 0
        %744 = vmatpush1.bf16.msra.mxu0 0
        %745 = vmatprep.subr.bf16.mxu0 0
        %746 = vmatpush1.bf16.msra.mxu0 0
        %747 = vmatprep.subr.bf16.mxu0 0
        %748 = vmatpush1.bf16.msra.mxu0 0
        %749 = vmatprep.subr.bf16.mxu0 0
        %750 = vmatpush1.bf16.msra.mxu0 0
        %751 = vmatprep.subr.bf16.mxu0 0
        %752 = vmatpush1.bf16.msra.mxu0 0
        %753 = vmatprep.subr.bf16.mxu0 0
        %754 = vmatpush1.bf16.msra.mxu0 0
        %755 = vmatprep.mubr.bf16.mxu0 0
        %756 = vmatmul.mubr.bf16.gmra.mrb[0].mxu0 %v721
        %v757 = vpop.f32.mrb[0].mxu0
        %v758 = vadd.f32 %v705, %v757
        %v759 = vpop.f32.mrb[0].mxu0
        %v760 = vpop.f32.mrb[0].mxu0
        %v761 = vadd.f32 %v705, %v760
        %v762 = vpop.f32.mrb[0].mxu0
        %763 = vdwg.mxu0
        %v764 = vld [vmem:[%s4] sm:$0xf]
        %v765 = vld [vmem:[%s4 + $0x4] sm:$0xf]
        %v766 = vld [vmem:[%s4 + $0x8] sm:$0xf]
        %v767 = vld [vmem:[%s4 + $0xc] sm:$0xf]
        %v768 = vld [vmem:[#allocation6] sm:$0x1]
        %v770 = vlaneseq
        %v771 = vshrl.u32 %v770, 7
        %v772 = vsub.s32 0, %v771
        %v773 = vrot.slane %v768, %v772
        %v779 = vunpack.c.l.b16 %v764
        %v780 = vunpack.c.l.b16 %v765
        %v781 = vunpack.c.l.b16 %v766
        %v782 = vunpack.c.l.b16 %v767
        %v783 = vpack.c.b16 %v780, %v779
        %v784 = vpack.c.b16 %v782, %v781
        %787 = vmatprep.subr.bf16.mxu0 0
        %788 = vmatpush1.bf16.msra.mxu0 %v783
        %789 = vmatprep.subr.bf16.mxu0 0
        %790 = vmatpush1.bf16.msra.mxu0 %v784
        %791 = vmatprep.subr.bf16.mxu0 0
        %792 = vmatpush1.bf16.msra.mxu0 0
        %793 = vmatprep.subr.bf16.mxu0 0
        %794 = vmatpush1.bf16.msra.mxu0 0
        %795 = vmatprep.subr.bf16.mxu0 0
        %796 = vmatpush1.bf16.msra.mxu0 0
        %797 = vmatprep.subr.bf16.mxu0 0
        %798 = vmatpush1.bf16.msra.mxu0 0
        %799 = vmatprep.subr.bf16.mxu0 0
        %800 = vmatpush1.bf16.msra.mxu0 0
        %801 = vmatprep.subr.bf16.mxu0 0
        %802 = vmatpush1.bf16.msra.mxu0 0
        %803 = vmatprep.subr.bf16.mxu0 0
        %804 = vmatpush1.bf16.msra.mxu0 0
        %805 = vmatprep.subr.bf16.mxu0 0
        %806 = vmatpush1.bf16.msra.mxu0 0
        %807 = vmatprep.subr.bf16.mxu0 0
        %808 = vmatpush1.bf16.msra.mxu0 0
        %809 = vmatprep.subr.bf16.mxu0 0
        %810 = vmatpush1.bf16.msra.mxu0 0
        %811 = vmatprep.subr.bf16.mxu0 0
        %812 = vmatpush1.bf16.msra.mxu0 0
        %813 = vmatprep.subr.bf16.mxu0 0
        %814 = vmatpush1.bf16.msra.mxu0 0
        %815 = vmatprep.subr.bf16.mxu0 0
        %816 = vmatpush1.bf16.msra.mxu0 0
        %817 = vmatprep.subr.bf16.mxu0 0
        %818 = vmatpush1.bf16.msra.mxu0 0
        %819 = vmatprep.mubr.bf16.mxu0 0
        %820 = vmatmul.mubr.bf16.gmra.mrb[0].mxu0 %v721
        %v821 = vpop.f32.mrb[0].mxu0
        %v822 = vadd.f32 %v773, %v821
        %v823 = vpop.f32.mrb[0].mxu0
        %v824 = vpop.f32.mrb[0].mxu0
        %v825 = vadd.f32 %v773, %v824
        %v826 = vpop.f32.mrb[0].mxu0
        %827 = vdwg.mxu0
        %v828 = vld [vmem:[#allocation8] sm:$0xf]
        %v829 = vld [vmem:[#allocation8 + $0x4] sm:$0xf]
        %v830 = vld [vmem:[#allocation8 + $0x8] sm:$0xf]
        %v831 = vld [vmem:[#allocation8 + $0xc] sm:$0xf]
        %v832 = vld [vmem:[#allocation9] sm:$0x1]
        %v834 = vlaneseq
        %v835 = vshrl.u32 %v834, 7
        %v836 = vsub.s32 0, %v835
        %v837 = vrot.slane %v832, %v836
        %v843 = vunpack.c.l.b16 %v828
        %v844 = vunpack.c.l.b16 %v829
        %v845 = vunpack.c.l.b16 %v830
        %v846 = vunpack.c.l.b16 %v831
        %v847 = vpack.c.b16 %v844, %v843
        %v848 = vpack.c.b16 %v846, %v845
        %851 = vmatprep.subr.bf16.mxu0 0
        %852 = vmatpush1.bf16.msra.mxu0 %v847
        %853 = vmatprep.subr.bf16.mxu0 0
        %854 = vmatpush1.bf16.msra.mxu0 %v848
        %855 = vmatprep.subr.bf16.mxu0 0
        %856 = vmatpush1.bf16.msra.mxu0 0
        %857 = vmatprep.subr.bf16.mxu0 0
        %858 = vmatpush1.bf16.msra.mxu0 0
        %859 = vmatprep.subr.bf16.mxu0 0
        %860 = vmatpush1.bf16.msra.mxu0 0
        %861 = vmatprep.subr.bf16.mxu0 0
        %862 = vmatpush1.bf16.msra.mxu0 0
        %863 = vmatprep.subr.bf16.mxu0 0
        %864 = vmatpush1.bf16.msra.mxu0 0
        %865 = vmatprep.subr.bf16.mxu0 0
        %866 = vmatpush1.bf16.msra.mxu0 0
        %867 = vmatprep.subr.bf16.mxu0 0
        %868 = vmatpush1.bf16.msra.mxu0 0
        %869 = vmatprep.subr.bf16.mxu0 0
        %870 = vmatpush1.bf16.msra.mxu0 0
        %871 = vmatprep.subr.bf16.mxu0 0
        %872 = vmatpush1.bf16.msra.mxu0 0
        %873 = vmatprep.subr.bf16.mxu0 0
        %874 = vmatpush1.bf16.msra.mxu0 0
        %875 = vmatprep.subr.bf16.mxu0 0
        %876 = vmatpush1.bf16.msra.mxu0 0
        %877 = vmatprep.subr.bf16.mxu0 0
        %878 = vmatpush1.bf16.msra.mxu0 0
        %879 = vmatprep.subr.bf16.mxu0 0
        %880 = vmatpush1.bf16.msra.mxu0 0
        %881 = vmatprep.subr.bf16.mxu0 0
        %882 = vmatpush1.bf16.msra.mxu0 0
        %883 = vmatprep.mubr.bf16.mxu0 0
        %884 = vmatmul.mubr.bf16.gmra.mrb[0].mxu0 %v721
        %v885 = vpop.f32.mrb[0].mxu0
        %v886 = vadd.f32 %v837, %v885
        %v887 = vpop.f32.mrb[0].mxu0
        %v888 = vpop.f32.mrb[0].mxu0
        %v889 = vadd.f32 %v837, %v888
        %v890 = vpop.f32.mrb[0].mxu0
        %891 = vdwg.mxu0
        %v892 = vpack.c.bf16 %v758, %v758
        %v893 = vpack.c.bf16 %v761, %v761
        %v894 = vpack.c.bf16 %v822, %v822
        %v895 = vpack.c.bf16 %v825, %v825
        %v896 = vpack.c.bf16 %v886, %v886
        %v897 = vpack.c.bf16 %v889, %v889
        %vm898 = vcmask 64512
        %v900 = vsel %vm898, %v892, 0
        %v903 = vsel %vm898, %v894, 0
        %905 = vmatprep.subr.bf16.mxu0 0
        %906 = vmatpush1.bf16.xpose.msra.mxu0 %v903
        %907 = vmatprep.subr.bf16.mxu0 0
        %908 = vmatpush1.bf16.xpose.msra.mxu0 0
        %909 = vmatprep.subr.bf16.mxu0 0
        %910 = vmatpush1.bf16.xpose.msra.mxu0 0
        %911 = vmatprep.subr.bf16.mxu0 0
        %912 = vmatpush1.bf16.xpose.msra.mxu0 0
        %913 = vmatprep.subr.bf16.mxu0 0
        %914 = vmatpush1.bf16.xpose.msra.mxu0 0
        %915 = vmatprep.subr.bf16.mxu0 0
        %916 = vmatpush1.bf16.xpose.msra.mxu0 0
        %917 = vmatprep.subr.bf16.mxu0 0
        %918 = vmatpush1.bf16.xpose.msra.mxu0 0
        %919 = vmatprep.subr.bf16.mxu0 0
        %920 = vmatpush1.bf16.xpose.msra.mxu0 0
        %921 = vmatprep.subr.bf16.mxu0 0
        %922 = vmatpush1.bf16.xpose.msra.mxu0 0
        %923 = vmatprep.subr.bf16.mxu0 0
        %924 = vmatpush1.bf16.xpose.msra.mxu0 0
        %925 = vmatprep.subr.bf16.mxu0 0
        %926 = vmatpush1.bf16.xpose.msra.mxu0 0
        %927 = vmatprep.subr.bf16.mxu0 0
        %928 = vmatpush1.bf16.xpose.msra.mxu0 0
        %929 = vmatprep.subr.bf16.mxu0 0
        %930 = vmatpush1.bf16.xpose.msra.mxu0 0
        %931 = vmatprep.subr.bf16.mxu0 0
        %932 = vmatpush1.bf16.xpose.msra.mxu0 0
        %933 = vmatprep.subr.bf16.mxu0 0
        %934 = vmatpush1.bf16.xpose.msra.mxu0 0
        %935 = vmatprep.subr.bf16.mxu0 0
        %936 = vmatpush1.bf16.xpose.msra.mxu0 0
        %937 = vmatprep.mubr.bf16.mxu0 0
        %938 = vmatmul.mubr.bf16.gmra.mrb[0].mxu0 %v900
        %v939 = vpop.f32.mrb[0].mxu0
        %v940 = vadd.f32 0.0, %v939
        %v941 = vpop.f32.mrb[0].mxu0
        %v942 = vpop.f32.mrb[0].mxu0
        %v943 = vpop.f32.mrb[0].mxu0
        %944 = vdwg.mxu0
        %v946 = vsel %vm898, %v893, 0
        %v949 = vsel %vm898, %v895, 0
        %951 = vmatprep.subr.bf16.mxu0 0
        %952 = vmatpush1.bf16.xpose.msra.mxu0 %v949
        %953 = vmatprep.subr.bf16.mxu0 0
        %954 = vmatpush1.bf16.xpose.msra.mxu0 0
        %955 = vmatprep.subr.bf16.mxu0 0
        %956 = vmatpush1.bf16.xpose.msra.mxu0 0
        %957 = vmatprep.subr.bf16.mxu0 0
        %958 = vmatpush1.bf16.xpose.msra.mxu0 0
        %959 = vmatprep.subr.bf16.mxu0 0
        %960 = vmatpush1.bf16.xpose.msra.mxu0 0
        %961 = vmatprep.subr.bf16.mxu0 0
        %962 = vmatpush1.bf16.xpose.msra.mxu0 0
        %963 = vmatprep.subr.bf16.mxu0 0
        %964 = vmatpush1.bf16.xpose.msra.mxu0 0
        %965 = vmatprep.subr.bf16.mxu0 0
        %966 = vmatpush1.bf16.xpose.msra.mxu0 0
        %967 = vmatprep.subr.bf16.mxu0 0
        %968 = vmatpush1.bf16.xpose.msra.mxu0 0
        %969 = vmatprep.subr.bf16.mxu0 0
        %970 = vmatpush1.bf16.xpose.msra.mxu0 0
        %971 = vmatprep.subr.bf16.mxu0 0
        %972 = vmatpush1.bf16.xpose.msra.mxu0 0
        %973 = vmatprep.subr.bf16.mxu0 0
        %974 = vmatpush1.bf16.xpose.msra.mxu0 0
        %975 = vmatprep.subr.bf16.mxu0 0
        %976 = vmatpush1.bf16.xpose.msra.mxu0 0
        %977 = vmatprep.subr.bf16.mxu0 0
        %978 = vmatpush1.bf16.xpose.msra.mxu0 0
        %979 = vmatprep.subr.bf16.mxu0 0
        %980 = vmatpush1.bf16.xpose.msra.mxu0 0
        %981 = vmatprep.subr.bf16.mxu0 0
        %982 = vmatpush1.bf16.xpose.msra.mxu0 0
        %983 = vmatprep.mubr.bf16.mxu0 0
        %984 = vmatmul.mubr.bf16.gmra.mrb[0].mxu0 %v946
        %v985 = vpop.f32.mrb[0].mxu0
        %v986 = vadd.f32 0.0, %v985
        %v987 = vpop.f32.mrb[0].mxu0
        %v988 = vpop.f32.mrb[0].mxu0
        %v989 = vpop.f32.mrb[0].mxu0
        %990 = vdwg.mxu0
        %v991 = vmul.f32 %v940, 0.35355338
        %v992 = vmul.f32 %v986, 0.35355338
        %v995 = vlaneseq
        %v996 = vshrl.u32 %v995, 7
        %v997 = vsub.s32 0, %v996
        %v998 = vrot.slane %v694, %v997
        %v999 = vlaneseq
        %v1000 = vshrl.u32 %v999, 7
        %v1001 = vsub.s32 0, %v1000
        %v1002 = vrot.slane %v695, %v1001
        %v1005 = vadd.f32 %v991, %v998
        %v1006 = vadd.f32 %v992, %v1002
        %v1007 = vsel %vm898, %v1005, -inf
        %1008 = vmax.xlane.f32.xlu0 %v1007
        %v1009 = vpop.xlane.xlu0 %1008
        %v1010 = vsel %vm898, %v1006, -inf
        %1011 = vmax.xlane.f32.xlu0 %v1010
        %v1012 = vpop.xlane.xlu0 %1011
        %v1013 = vsub.f32 %v1005, %v1009
        %v1014 = vsub.f32 %v1006, %v1012
        %v1015 = vmul.f32 %v1013, 1.442695
        %v1016 = vpow.pop %v1015
        %v1017 = vmul.f32 %v1014, 1.442695
        %v1018 = vpow.pop %v1017
        %v1019 = vsel %vm898, %v1016, 0.0
        %1020 = vadd.xlane.f32.xlu0 %v1019
        %v1021 = vpop.xlane.xlu0 %1020
        %v1022 = vsel %vm898, %v1018, 0.0
        %1023 = vadd.xlane.f32.xlu0 %v1022
        %v1024 = vpop.xlane.xlu0 %1023
        %v1025 = vrcp.pop %v1021
        %v1026 = vrcp.pop %v1024
        %v1027 = vmul.f32 %v1016, %v1025
        %v1028 = vmul.f32 %v1018, %v1026
        %v1029 = vpack.c.bf16 %v1027, %v1027
        %v1030 = vpack.c.bf16 %v1028, %v1028
        %v1032 = vsel %vm898, %v1029, 0
        %vm1034 = vcmask 1043456
        %v1036 = vsel %vm1034, %v896, 0
        %1038 = vmatprep.subr.bf16.mxu0 0
        %1039 = vmatpush1.bf16.msra.mxu0 %v1036
        %1040 = vmatprep.subr.bf16.mxu0 0
        %1041 = vmatpush1.bf16.msra.mxu0 0
        %1042 = vmatprep.subr.bf16.mxu0 0
        %1043 = vmatpush1.bf16.msra.mxu0 0
        %1044 = vmatprep.subr.bf16.mxu0 0
        %1045 = vmatpush1.bf16.msra.mxu0 0
        %1046 = vmatprep.subr.bf16.mxu0 0
        %1047 = vmatpush1.bf16.msra.mxu0 0
        %1048 = vmatprep.subr.bf16.mxu0 0
        %1049 = vmatpush1.bf16.msra.mxu0 0
        %1050 = vmatprep.subr.bf16.mxu0 0
        %1051 = vmatpush1.bf16.msra.mxu0 0
        %1052 = vmatprep.subr.bf16.mxu0 0
        %1053 = vmatpush1.bf16.msra.mxu0 0
        %1054 = vmatprep.subr.bf16.mxu0 0
        %1055 = vmatpush1.bf16.msra.mxu0 0
        %1056 = vmatprep.subr.bf16.mxu0 0
        %1057 = vmatpush1.bf16.msra.mxu0 0
        %1058 = vmatprep.subr.bf16.mxu0 0
        %1059 = vmatpush1.bf16.msra.mxu0 0
        %1060 = vmatprep.subr.bf16.mxu0 0
        %1061 = vmatpush1.bf16.msra.mxu0 0
        %1062 = vmatprep.subr.bf16.mxu0 0
        %1063 = vmatpush1.bf16.msra.mxu0 0
        %1064 = vmatprep.subr.bf16.mxu0 0
        %1065 = vmatpush1.bf16.msra.mxu0 0
        %1066 = vmatprep.subr.bf16.mxu0 0
        %1067 = vmatpush1.bf16.msra.mxu0 0
        %1068 = vmatprep.subr.bf16.mxu0 0
        %1069 = vmatpush1.bf16.msra.mxu0 0
        %1070 = vmatprep.mubr.bf16.mxu0 0
        %1071 = vmatmul.mubr.bf16.gmra.mrb[0].mxu0 %v1032
        %v1072 = vpop.f32.mrb[0].mxu0
        %v1073 = vadd.f32 0.0, %v1072
        %v1074 = vpop.f32.mrb[0].mxu0
        %v1075 = vpop.f32.mrb[0].mxu0
        %v1076 = vpop.f32.mrb[0].mxu0
        %1077 = vdwg.mxu0
        %v1079 = vsel %vm898, %v1030, 0
        %v1082 = vsel %vm1034, %v897, 0
        %1084 = vmatprep.subr.bf16.mxu0 0
        %1085 = vmatpush1.bf16.msra.mxu0 %v1082
        %1086 = vmatprep.subr.bf16.mxu0 0
        %1087 = vmatpush1.bf16.msra.mxu0 0
        %1088 = vmatprep.subr.bf16.mxu0 0
        %1089 = vmatpush1.bf16.msra.mxu0 0
        %1090 = vmatprep.subr.bf16.mxu0 0
        %1091 = vmatpush1.bf16.msra.mxu0 0
        %1092 = vmatprep.subr.bf16.mxu0 0
        %1093 = vmatpush1.bf16.msra.mxu0 0
        %1094 = vmatprep.subr.bf16.mxu0 0
        %1095 = vmatpush1.bf16.msra.mxu0 0
        %1096 = vmatprep.subr.bf16.mxu0 0
        %1097 = vmatpush1.bf16.msra.mxu0 0
        %1098 = vmatprep.subr.bf16.mxu0 0
        %1099 = vmatpush1.bf16.msra.mxu0 0
        %1100 = vmatprep.subr.bf16.mxu0 0
        %1101 = vmatpush1.bf16.msra.mxu0 0
        %1102 = vmatprep.subr.bf16.mxu0 0
        %1103 = vmatpush1.bf16.msra.mxu0 0
        %1104 = vmatprep.subr.bf16.mxu0 0
        %1105 = vmatpush1.bf16.msra.mxu0 0
        %1106 = vmatprep.subr.bf16.mxu0 0
        %1107 = vmatpush1.bf16.msra.mxu0 0
        %1108 = vmatprep.subr.bf16.mxu0 0
        %1109 = vmatpush1.bf16.msra.mxu0 0
        %1110 = vmatprep.subr.bf16.mxu0 0
        %1111 = vmatpush1.bf16.msra.mxu0 0
        %1112 = vmatprep.subr.bf16.mxu0 0
        %1113 = vmatpush1.bf16.msra.mxu0 0
        %1114 = vmatprep.subr.bf16.mxu0 0
        %1115 = vmatpush1.bf16.msra.mxu0 0
        %1116 = vmatprep.mubr.bf16.mxu0 0
        %1117 = vmatmul.mubr.bf16.gmra.mrb[0].mxu0 %v1079
        %v1118 = vpop.f32.mrb[0].mxu0
        %v1119 = vadd.f32 0.0, %v1118
        %v1120 = vpop.f32.mrb[0].mxu0
        %v1121 = vpop.f32.mrb[0].mxu0
        %v1122 = vpop.f32.mrb[0].mxu0
        %1123 = vdwg.mxu0
        %1125 = vrot.lane.b32.xlu0 %v892, 120
        %v1126 = vpop.permute.xlu0 %1125
        %1128 = vrot.lane.b32.xlu0 %v894, 120
        %v1129 = vpop.permute.xlu0 %1128
        %v1131 = vsel %vm898, %v1126, 0
        %v1134 = vsel %vm898, %v1129, 0
        %1136 = vmatprep.subr.bf16.mxu0 0
        %1137 = vmatpush1.bf16.xpose.msra.mxu0 %v1134
        %1138 = vmatprep.subr.bf16.mxu0 0
        %1139 = vmatpush1.bf16.xpose.msra.mxu0 0
        %1140 = vmatprep.subr.bf16.mxu0 0
        %1141 = vmatpush1.bf16.xpose.msra.mxu0 0
        %1142 = vmatprep.subr.bf16.mxu0 0
        %1143 = vmatpush1.bf16.xpose.msra.mxu0 0
        %1144 = vmatprep.subr.bf16.mxu0 0
        %1145 = vmatpush1.bf16.xpose.msra.mxu0 0
        %1146 = vmatprep.subr.bf16.mxu0 0
        %1147 = vmatpush1.bf16.xpose.msra.mxu0 0
        %1148 = vmatprep.subr.bf16.mxu0 0
        %1149 = vmatpush1.bf16.xpose.msra.mxu0 0
        %1150 = vmatprep.subr.bf16.mxu0 0
        %1151 = vmatpush1.bf16.xpose.msra.mxu0 0
        %1152 = vmatprep.subr.bf16.mxu0 0
        %1153 = vmatpush1.bf16.xpose.msra.mxu0 0
        %1154 = vmatprep.subr.bf16.mxu0 0
        %1155 = vmatpush1.bf16.xpose.msra.mxu0 0
        %1156 = vmatprep.subr.bf16.mxu0 0
        %1157 = vmatpush1.bf16.xpose.msra.mxu0 0
        %1158 = vmatprep.subr.bf16.mxu0 0
        %1159 = vmatpush1.bf16.xpose.msra.mxu0 0
        %1160 = vmatprep.subr.bf16.mxu0 0
        %1161 = vmatpush1.bf16.xpose.msra.mxu0 0
        %1162 = vmatprep.subr.bf16.mxu0 0
        %1163 = vmatpush1.bf16.xpose.msra.mxu0 0
        %1164 = vmatprep.subr.bf16.mxu0 0
        %1165 = vmatpush1.bf16.xpose.msra.mxu0 0
        %1166 = vmatprep.subr.bf16.mxu0 0
        %1167 = vmatpush1.bf16.xpose.msra.mxu0 0
        %1168 = vmatprep.mubr.bf16.mxu0 0
        %1169 = vmatmul.mubr.bf16.gmra.mrb[0].mxu0 %v1131
        %v1170 = vpop.f32.mrb[0].mxu0
        %v1171 = vadd.f32 0.0, %v1170
        %v1172 = vpop.f32.mrb[0].mxu0
        %v1173 = vpop.f32.mrb[0].mxu0
        %v1174 = vpop.f32.mrb[0].mxu0
        %1175 = vdwg.mxu0
        %1177 = vrot.lane.b32.xlu0 %v893, 120
        %v1178 = vpop.permute.xlu0 %1177
        %1180 = vrot.lane.b32.xlu0 %v895, 120
        %v1181 = vpop.permute.xlu0 %1180
        %v1183 = vsel %vm898, %v1178, 0
        %v1186 = vsel %vm898, %v1181, 0
        %1188 = vmatprep.subr.bf16.mxu0 0
        %1189 = vmatpush1.bf16.xpose.msra.mxu0 %v1186
        %1190 = vmatprep.subr.bf16.mxu0 0
        %1191 = vmatpush1.bf16.xpose.msra.mxu0 0
        %1192 = vmatprep.subr.bf16.mxu0 0
        %1193 = vmatpush1.bf16.xpose.msra.mxu0 0
        %1194 = vmatprep.subr.bf16.mxu0 0
        %1195 = vmatpush1.bf16.xpose.msra.mxu0 0
        %1196 = vmatprep.subr.bf16.mxu0 0
        %1197 = vmatpush1.bf16.xpose.msra.mxu0 0
        %1198 = vmatprep.subr.bf16.mxu0 0
        %1199 = vmatpush1.bf16.xpose.msra.mxu0 0
        %1200 = vmatprep.subr.bf16.mxu0 0
        %1201 = vmatpush1.bf16.xpose.msra.mxu0 0
        %1202 = vmatprep.subr.bf16.mxu0 0
        %1203 = vmatpush1.bf16.xpose.msra.mxu0 0
        %1204 = vmatprep.subr.bf16.mxu0 0
        %1205 = vmatpush1.bf16.xpose.msra.mxu0 0
        %1206 = vmatprep.subr.bf16.mxu0 0
        %1207 = vmatpush1.bf16.xpose.msra.mxu0 0
        %1208 = vmatprep.subr.bf16.mxu0 0
        %1209 = vmatpush1.bf16.xpose.msra.mxu0 0
        %1210 = vmatprep.subr.bf16.mxu0 0
        %1211 = vmatpush1.bf16.xpose.msra.mxu0 0
        %1212 = vmatprep.subr.bf16.mxu0 0
        %1213 = vmatpush1.bf16.xpose.msra.mxu0 0
        %1214 = vmatprep.subr.bf16.mxu0 0
        %1215 = vmatpush1.bf16.xpose.msra.mxu0 0
        %1216 = vmatprep.subr.bf16.mxu0 0
        %1217 = vmatpush1.bf16.xpose.msra.mxu0 0
        %1218 = vmatprep.subr.bf16.mxu0 0
        %1219 = vmatpush1.bf16.xpose.msra.mxu0 0
        %1220 = vmatprep.mubr.bf16.mxu0 0
        %1221 = vmatmul.mubr.bf16.gmra.mrb[0].mxu0 %v1183
        %v1222 = vpop.f32.mrb[0].mxu0
        %v1223 = vadd.f32 0.0, %v1222
        %v1224 = vpop.f32.mrb[0].mxu0
        %v1225 = vpop.f32.mrb[0].mxu0
        %v1226 = vpop.f32.mrb[0].mxu0
        %1227 = vdwg.mxu0
        %v1228 = vmul.f32 %v1171, 0.35355338
        %v1229 = vmul.f32 %v1223, 0.35355338
        %v1230 = vadd.f32 %v1228, %v998
        %v1231 = vadd.f32 %v1229, %v1002
        %v1232 = vsel %vm898, %v1230, -inf
        %1233 = vmax.xlane.f32.xlu0 %v1232
        %v1234 = vpop.xlane.xlu0 %1233
        %v1235 = vsel %vm898, %v1231, -inf
        %1236 = vmax.xlane.f32.xlu0 %v1235
        %v1237 = vpop.xlane.xlu0 %1236
        %v1238 = vsub.f32 %v1230, %v1234
        %v1239 = vsub.f32 %v1231, %v1237
        %v1240 = vmul.f32 %v1238, 1.442695
        %v1241 = vpow.pop %v1240
        %v1242 = vmul.f32 %v1239, 1.442695
        %v1243 = vpow.pop %v1242
        %v1244 = vsel %vm898, %v1241, 0.0
        %1245 = vadd.xlane.f32.xlu0 %v1244
        %v1246 = vpop.xlane.xlu0 %1245
        %v1247 = vsel %vm898, %v1243, 0.0
        %1248 = vadd.xlane.f32.xlu0 %v1247
        %v1249 = vpop.xlane.xlu0 %1248
        %v1250 = vrcp.pop %v1246
        %v1251 = vrcp.pop %v1249
        %v1252 = vmul.f32 %v1241, %v1250
        %v1253 = vmul.f32 %v1243, %v1251
        %v1254 = vpack.c.bf16 %v1252, %v1252
        %v1255 = vpack.c.bf16 %v1253, %v1253
        %1257 = vrot.lane.b32.xlu0 %v896, 120
        %v1258 = vpop.permute.xlu0 %1257
        %v1260 = vsel %vm898, %v1254, 0
        %v1263 = vsel %vm1034, %v1258, 0
        %1265 = vmatprep.subr.bf16.mxu0 0
        %1266 = vmatpush1.bf16.msra.mxu0 %v1263
        %1267 = vmatprep.subr.bf16.mxu0 0
        %1268 = vmatpush1.bf16.msra.mxu0 0
        %1269 = vmatprep.subr.bf16.mxu0 0
        %1270 = vmatpush1.bf16.msra.mxu0 0
        %1271 = vmatprep.subr.bf16.mxu0 0
        %1272 = vmatpush1.bf16.msra.mxu0 0
        %1273 = vmatprep.subr.bf16.mxu0 0
        %1274 = vmatpush1.bf16.msra.mxu0 0
        %1275 = vmatprep.subr.bf16.mxu0 0
        %1276 = vmatpush1.bf16.msra.mxu0 0
        %1277 = vmatprep.subr.bf16.mxu0 0
        %1278 = vmatpush1.bf16.msra.mxu0 0
        %1279 = vmatprep.subr.bf16.mxu0 0
        %1280 = vmatpush1.bf16.msra.mxu0 0
        %1281 = vmatprep.subr.bf16.mxu0 0
        %1282 = vmatpush1.bf16.msra.mxu0 0
        %1283 = vmatprep.subr.bf16.mxu0 0
        %1284 = vmatpush1.bf16.msra.mxu0 0
        %1285 = vmatprep.subr.bf16.mxu0 0
        %1286 = vmatpush1.bf16.msra.mxu0 0
        %1287 = vmatprep.subr.bf16.mxu0 0
        %1288 = vmatpush1.bf16.msra.mxu0 0
        %1289 = vmatprep.subr.bf16.mxu0 0
        %1290 = vmatpush1.bf16.msra.mxu0 0
        %1291 = vmatprep.subr.bf16.mxu0 0
        %1292 = vmatpush1.bf16.msra.mxu0 0
        %1293 = vmatprep.subr.bf16.mxu0 0
        %1294 = vmatpush1.bf16.msra.mxu0 0
        %1295 = vmatprep.subr.bf16.mxu0 0
        %1296 = vmatpush1.bf16.msra.mxu0 0
        %1297 = vmatprep.mubr.bf16.mxu0 0
        %1298 = vmatmul.mubr.bf16.gmra.mrb[0].mxu0 %v1260
        %v1299 = vpop.f32.mrb[0].mxu0
        %v1300 = vadd.f32 0.0, %v1299
        %v1301 = vpop.f32.mrb[0].mxu0
        %v1302 = vpop.f32.mrb[0].mxu0
        %v1303 = vpop.f32.mrb[0].mxu0
        %1304 = vdwg.mxu0
        %1306 = vrot.lane.b32.xlu0 %v897, 120
        %v1307 = vpop.permute.xlu0 %1306
        %v1309 = vsel %vm898, %v1255, 0
        %v1312 = vsel %vm1034, %v1307, 0
        %1314 = vmatprep.subr.bf16.mxu0 0
        %1315 = vmatpush1.bf16.msra.mxu0 %v1312
        %1316 = vmatprep.subr.bf16.mxu0 0
        %1317 = vmatpush1.bf16.msra.mxu0 0
        %1318 = vmatprep.subr.bf16.mxu0 0
        %1319 = vmatpush1.bf16.msra.mxu0 0
        %1320 = vmatprep.subr.bf16.mxu0 0
        %1321 = vmatpush1.bf16.msra.mxu0 0
        %1322 = vmatprep.subr.bf16.mxu0 0
        %1323 = vmatpush1.bf16.msra.mxu0 0
        %1324 = vmatprep.subr.bf16.mxu0 0
        %1325 = vmatpush1.bf16.msra.mxu0 0
        %1326 = vmatprep.subr.bf16.mxu0 0
        %1327 = vmatpush1.bf16.msra.mxu0 0
        %1328 = vmatprep.subr.bf16.mxu0 0
        %1329 = vmatpush1.bf16.msra.mxu0 0
        %1330 = vmatprep.subr.bf16.mxu0 0
        %1331 = vmatpush1.bf16.msra.mxu0 0
        %1332 = vmatprep.subr.bf16.mxu0 0
        %1333 = vmatpush1.bf16.msra.mxu0 0
        %1334 = vmatprep.subr.bf16.mxu0 0
        %1335 = vmatpush1.bf16.msra.mxu0 0
        %1336 = vmatprep.subr.bf16.mxu0 0
        %1337 = vmatpush1.bf16.msra.mxu0 0
        %1338 = vmatprep.subr.bf16.mxu0 0
        %1339 = vmatpush1.bf16.msra.mxu0 0
        %1340 = vmatprep.subr.bf16.mxu0 0
        %1341 = vmatpush1.bf16.msra.mxu0 0
        %1342 = vmatprep.subr.bf16.mxu0 0
        %1343 = vmatpush1.bf16.msra.mxu0 0
        %1344 = vmatprep.subr.bf16.mxu0 0
        %1345 = vmatpush1.bf16.msra.mxu0 0
        %1346 = vmatprep.mubr.bf16.mxu0 0
        %1347 = vmatmul.mubr.bf16.gmra.mrb[0].mxu0 %v1309
        %v1348 = vpop.f32.mrb[0].mxu0
        %v1349 = vadd.f32 0.0, %v1348
        %v1350 = vpop.f32.mrb[0].mxu0
        %v1351 = vpop.f32.mrb[0].mxu0
        %v1352 = vpop.f32.mrb[0].mxu0
        %1353 = vdwg.mxu0
        %1354 = vrot.lane.b32.xlu0 %v892, 112
        %v1355 = vpop.permute.xlu0 %1354
        %1356 = vrot.lane.b32.xlu0 %v894, 112
        %v1357 = vpop.permute.xlu0 %1356
        %v1359 = vsel %vm898, %v1355, 0
        %v1362 = vsel %vm898, %v1357, 0
        %1364 = vmatprep.subr.bf16.mxu0 0
        %1365 = vmatpush1.bf16.xpose.msra.mxu0 %v1362
        %1366 = vmatprep.subr.bf16.mxu0 0
        %1367 = vmatpush1.bf16.xpose.msra.mxu0 0
        %1368 = vmatprep.subr.bf16.mxu0 0
        %1369 = vmatpush1.bf16.xpose.msra.mxu0 0
        %1370 = vmatprep.subr.bf16.mxu0 0
        %1371 = vmatpush1.bf16.xpose.msra.mxu0 0
        %1372 = vmatprep.subr.bf16.mxu0 0
        %1373 = vmatpush1.bf16.xpose.msra.mxu0 0
        %1374 = vmatprep.subr.bf16.mxu0 0
        %1375 = vmatpush1.bf16.xpose.msra.mxu0 0
        %1376 = vmatprep.subr.bf16.mxu0 0
        %1377 = vmatpush1.bf16.xpose.msra.mxu0 0
        %1378 = vmatprep.subr.bf16.mxu0 0
        %1379 = vmatpush1.bf16.xpose.msra.mxu0 0
        %1380 = vmatprep.subr.bf16.mxu0 0
        %1381 = vmatpush1.bf16.xpose.msra.mxu0 0
        %1382 = vmatprep.subr.bf16.mxu0 0
        %1383 = vmatpush1.bf16.xpose.msra.mxu0 0
        %1384 = vmatprep.subr.bf16.mxu0 0
        %1385 = vmatpush1.bf16.xpose.msra.mxu0 0
        %1386 = vmatprep.subr.bf16.mxu0 0
        %1387 = vmatpush1.bf16.xpose.msra.mxu0 0
        %1388 = vmatprep.subr.bf16.mxu0 0
        %1389 = vmatpush1.bf16.xpose.msra.mxu0 0
        %1390 = vmatprep.subr.bf16.mxu0 0
        %1391 = vmatpush1.bf16.xpose.msra.mxu0 0
        %1392 = vmatprep.subr.bf16.mxu0 0
        %1393 = vmatpush1.bf16.xpose.msra.mxu0 0
        %1394 = vmatprep.subr.bf16.mxu0 0
        %1395 = vmatpush1.bf16.xpose.msra.mxu0 0
        %1396 = vmatprep.mubr.bf16.mxu0 0
        %1397 = vmatmul.mubr.bf16.gmra.mrb[0].mxu0 %v1359
        %v1398 = vpop.f32.mrb[0].mxu0
        %v1399 = vadd.f32 0.0, %v1398
        %v1400 = vpop.f32.mrb[0].mxu0
        %v1401 = vpop.f32.mrb[0].mxu0
        %v1402 = vpop.f32.mrb[0].mxu0
        %1403 = vdwg.mxu0
        %1404 = vrot.lane.b32.xlu0 %v893, 112
        %v1405 = vpop.permute.xlu0 %1404
        %1406 = vrot.lane.b32.xlu0 %v895, 112
        %v1407 = vpop.permute.xlu0 %1406
        %v1409 = vsel %vm898, %v1405, 0
        %v1412 = vsel %vm898, %v1407, 0
        %1414 = vmatprep.subr.bf16.mxu0 0
        %1415 = vmatpush1.bf16.xpose.msra.mxu0 %v1412
        %1416 = vmatprep.subr.bf16.mxu0 0
        %1417 = vmatpush1.bf16.xpose.msra.mxu0 0
        %1418 = vmatprep.subr.bf16.mxu0 0
        %1419 = vmatpush1.bf16.xpose.msra.mxu0 0
        %1420 = vmatprep.subr.bf16.mxu0 0
        %1421 = vmatpush1.bf16.xpose.msra.mxu0 0
        %1422 = vmatprep.subr.bf16.mxu0 0
        %1423 = vmatpush1.bf16.xpose.msra.mxu0 0
        %1424 = vmatprep.subr.bf16.mxu0 0
        %1425 = vmatpush1.bf16.xpose.msra.mxu0 0
        %1426 = vmatprep.subr.bf16.mxu0 0
        %1427 = vmatpush1.bf16.xpose.msra.mxu0 0
        %1428 = vmatprep.subr.bf16.mxu0 0
        %1429 = vmatpush1.bf16.xpose.msra.mxu0 0
        %1430 = vmatprep.subr.bf16.mxu0 0
        %1431 = vmatpush1.bf16.xpose.msra.mxu0 0
        %1432 = vmatprep.subr.bf16.mxu0 0
        %1433 = vmatpush1.bf16.xpose.msra.mxu0 0
        %1434 = vmatprep.subr.bf16.mxu0 0
        %1435 = vmatpush1.bf16.xpose.msra.mxu0 0
        %1436 = vmatprep.subr.bf16.mxu0 0
        %1437 = vmatpush1.bf16.xpose.msra.mxu0 0
        %1438 = vmatprep.subr.bf16.mxu0 0
        %1439 = vmatpush1.bf16.xpose.msra.mxu0 0
        %1440 = vmatprep.subr.bf16.mxu0 0
        %1441 = vmatpush1.bf16.xpose.msra.mxu0 0
        %1442 = vmatprep.subr.bf16.mxu0 0
        %1443 = vmatpush1.bf16.xpose.msra.mxu0 0
        %1444 = vmatprep.subr.bf16.mxu0 0
        %1445 = vmatpush1.bf16.xpose.msra.mxu0 0
        %1446 = vmatprep.mubr.bf16.mxu0 0
        %1447 = vmatmul.mubr.bf16.gmra.mrb[0].mxu0 %v1409
        %v1448 = vpop.f32.mrb[0].mxu0
        %v1449 = vadd.f32 0.0, %v1448
        %v1450 = vpop.f32.mrb[0].mxu0
        %v1451 = vpop.f32.mrb[0].mxu0
        %v1452 = vpop.f32.mrb[0].mxu0
        %1453 = vdwg.mxu0
        %v1454 = vmul.f32 %v1399, 0.35355338
        %v1455 = vmul.f32 %v1449, 0.35355338
        %v1456 = vadd.f32 %v1454, %v998
        %v1457 = vadd.f32 %v1455, %v1002
        %v1458 = vsel %vm898, %v1456, -inf
        %1459 = vmax.xlane.f32.xlu0 %v1458
        %v1460 = vpop.xlane.xlu0 %1459
        %v1461 = vsel %vm898, %v1457, -inf
        %1462 = vmax.xlane.f32.xlu0 %v1461
        %v1463 = vpop.xlane.xlu0 %1462
        %v1464 = vsub.f32 %v1456, %v1460
        %v1465 = vsub.f32 %v1457, %v1463
        %v1466 = vmul.f32 %v1464, 1.442695
        %v1467 = vpow.pop %v1466
        %v1468 = vmul.f32 %v1465, 1.442695
        %v1469 = vpow.pop %v1468
        %v1470 = vsel %vm898, %v1467, 0.0
        %1471 = vadd.xlane.f32.xlu0 %v1470
        %v1472 = vpop.xlane.xlu0 %1471
        %v1473 = vsel %vm898, %v1469, 0.0
        %1474 = vadd.xlane.f32.xlu0 %v1473
        %v1475 = vpop.xlane.xlu0 %1474
        %v1476 = vrcp.pop %v1472
        %v1477 = vrcp.pop %v1475
        %v1478 = vmul.f32 %v1467, %v1476
        %v1479 = vmul.f32 %v1469, %v1477
        %v1480 = vpack.c.bf16 %v1478, %v1478
        %v1481 = vpack.c.bf16 %v1479, %v1479
        %1482 = vrot.lane.b32.xlu0 %v896, 112
        %v1483 = vpop.permute.xlu0 %1482
        %v1485 = vsel %vm898, %v1480, 0
        %v1488 = vsel %vm1034, %v1483, 0
        %1490 = vmatprep.subr.bf16.mxu0 0
        %1491 = vmatpush1.bf16.msra.mxu0 %v1488
        %1492 = vmatprep.subr.bf16.mxu0 0
        %1493 = vmatpush1.bf16.msra.mxu0 0
        %1494 = vmatprep.subr.bf16.mxu0 0
        %1495 = vmatpush1.bf16.msra.mxu0 0
        %1496 = vmatprep.subr.bf16.mxu0 0
        %1497 = vmatpush1.bf16.msra.mxu0 0
        %1498 = vmatprep.subr.bf16.mxu0 0
        %1499 = vmatpush1.bf16.msra.mxu0 0
        %1500 = vmatprep.subr.bf16.mxu0 0
        %1501 = vmatpush1.bf16.msra.mxu0 0
        %1502 = vmatprep.subr.bf16.mxu0 0
        %1503 = vmatpush1.bf16.msra.mxu0 0
        %1504 = vmatprep.subr.bf16.mxu0 0
        %1505 = vmatpush1.bf16.msra.mxu0 0
        %1506 = vmatprep.subr.bf16.mxu0 0
        %1507 = vmatpush1.bf16.msra.mxu0 0
        %1508 = vmatprep.subr.bf16.mxu0 0
        %1509 = vmatpush1.bf16.msra.mxu0 0
        %1510 = vmatprep.subr.bf16.mxu0 0
        %1511 = vmatpush1.bf16.msra.mxu0 0
        %1512 = vmatprep.subr.bf16.mxu0 0
        %1513 = vmatpush1.bf16.msra.mxu0 0
        %1514 = vmatprep.subr.bf16.mxu0 0
        %1515 = vmatpush1.bf16.msra.mxu0 0
        %1516 = vmatprep.subr.bf16.mxu0 0
        %1517 = vmatpush1.bf16.msra.mxu0 0
        %1518 = vmatprep.subr.bf16.mxu0 0
        %1519 = vmatpush1.bf16.msra.mxu0 0
        %1520 = vmatprep.subr.bf16.mxu0 0
        %1521 = vmatpush1.bf16.msra.mxu0 0
        %1522 = vmatprep.mubr.bf16.mxu0 0
        %1523 = vmatmul.mubr.bf16.gmra.mrb[0].mxu0 %v1485
        %v1524 = vpop.f32.mrb[0].mxu0
        %v1525 = vadd.f32 0.0, %v1524
        %v1526 = vpop.f32.mrb[0].mxu0
        %v1527 = vpop.f32.mrb[0].mxu0
        %v1528 = vpop.f32.mrb[0].mxu0
        %1529 = vdwg.mxu0
        %1530 = vrot.lane.b32.xlu0 %v897, 112
        %v1531 = vpop.permute.xlu0 %1530
        %v1533 = vsel %vm898, %v1481, 0
        %v1536 = vsel %vm1034, %v1531, 0
        %1538 = vmatprep.subr.bf16.mxu0 0
        %1539 = vmatpush1.bf16.msra.mxu0 %v1536
        %1540 = vmatprep.subr.bf16.mxu0 0
        %1541 = vmatpush1.bf16.msra.mxu0 0
        %1542 = vmatprep.subr.bf16.mxu0 0
        %1543 = vmatpush1.bf16.msra.mxu0 0
        %1544 = vmatprep.subr.bf16.mxu0 0
        %1545 = vmatpush1.bf16.msra.mxu0 0
        %1546 = vmatprep.subr.bf16.mxu0 0
        %1547 = vmatpush1.bf16.msra.mxu0 0
        %1548 = vmatprep.subr.bf16.mxu0 0
        %1549 = vmatpush1.bf16.msra.mxu0 0
        %1550 = vmatprep.subr.bf16.mxu0 0
        %1551 = vmatpush1.bf16.msra.mxu0 0
        %1552 = vmatprep.subr.bf16.mxu0 0
        %1553 = vmatpush1.bf16.msra.mxu0 0
        %1554 = vmatprep.subr.bf16.mxu0 0
        %1555 = vmatpush1.bf16.msra.mxu0 0
        %1556 = vmatprep.subr.bf16.mxu0 0
        %1557 = vmatpush1.bf16.msra.mxu0 0
        %1558 = vmatprep.subr.bf16.mxu0 0
        %1559 = vmatpush1.bf16.msra.mxu0 0
        %1560 = vmatprep.subr.bf16.mxu0 0
        %1561 = vmatpush1.bf16.msra.mxu0 0
        %1562 = vmatprep.subr.bf16.mxu0 0
        %1563 = vmatpush1.bf16.msra.mxu0 0
        %1564 = vmatprep.subr.bf16.mxu0 0
        %1565 = vmatpush1.bf16.msra.mxu0 0
        %1566 = vmatprep.subr.bf16.mxu0 0
        %1567 = vmatpush1.bf16.msra.mxu0 0
        %1568 = vmatprep.subr.bf16.mxu0 0
        %1569 = vmatpush1.bf16.msra.mxu0 0
        %1570 = vmatprep.mubr.bf16.mxu0 0
        %1571 = vmatmul.mubr.bf16.gmra.mrb[0].mxu0 %v1533
        %v1572 = vpop.f32.mrb[0].mxu0
        %v1573 = vadd.f32 0.0, %v1572
        %v1574 = vpop.f32.mrb[0].mxu0
        %v1575 = vpop.f32.mrb[0].mxu0
        %v1576 = vpop.f32.mrb[0].mxu0
        %1577 = vdwg.mxu0
        %1578 = vrot.lane.b32.xlu0 %v892, 104
        %v1579 = vpop.permute.xlu0 %1578
        %1580 = vrot.lane.b32.xlu0 %v894, 104
        %v1581 = vpop.permute.xlu0 %1580
        %v1583 = vsel %vm898, %v1579, 0
        %v1586 = vsel %vm898, %v1581, 0
        %1588 = vmatprep.subr.bf16.mxu0 0
        %1589 = vmatpush1.bf16.xpose.msra.mxu0 %v1586
        %1590 = vmatprep.subr.bf16.mxu0 0
        %1591 = vmatpush1.bf16.xpose.msra.mxu0 0
        %1592 = vmatprep.subr.bf16.mxu0 0
        %1593 = vmatpush1.bf16.xpose.msra.mxu0 0
        %1594 = vmatprep.subr.bf16.mxu0 0
        %1595 = vmatpush1.bf16.xpose.msra.mxu0 0
        %1596 = vmatprep.subr.bf16.mxu0 0
        %1597 = vmatpush1.bf16.xpose.msra.mxu0 0
        %1598 = vmatprep.subr.bf16.mxu0 0
        %1599 = vmatpush1.bf16.xpose.msra.mxu0 0
        %1600 = vmatprep.subr.bf16.mxu0 0
        %1601 = vmatpush1.bf16.xpose.msra.mxu0 0
        %1602 = vmatprep.subr.bf16.mxu0 0
        %1603 = vmatpush1.bf16.xpose.msra.mxu0 0
        %1604 = vmatprep.subr.bf16.mxu0 0
        %1605 = vmatpush1.bf16.xpose.msra.mxu0 0
        %1606 = vmatprep.subr.bf16.mxu0 0
        %1607 = vmatpush1.bf16.xpose.msra.mxu0 0
        %1608 = vmatprep.subr.bf16.mxu0 0
        %1609 = vmatpush1.bf16.xpose.msra.mxu0 0
        %1610 = vmatprep.subr.bf16.mxu0 0
        %1611 = vmatpush1.bf16.xpose.msra.mxu0 0
        %1612 = vmatprep.subr.bf16.mxu0 0
        %1613 = vmatpush1.bf16.xpose.msra.mxu0 0
        %1614 = vmatprep.subr.bf16.mxu0 0
        %1615 = vmatpush1.bf16.xpose.msra.mxu0 0
        %1616 = vmatprep.subr.bf16.mxu0 0
        %1617 = vmatpush1.bf16.xpose.msra.mxu0 0
        %1618 = vmatprep.subr.bf16.mxu0 0
        %1619 = vmatpush1.bf16.xpose.msra.mxu0 0
        %1620 = vmatprep.mubr.bf16.mxu0 0
        %1621 = vmatmul.mubr.bf16.gmra.mrb[0].mxu0 %v1583
        %v1622 = vpop.f32.mrb[0].mxu0
        %v1623 = vadd.f32 0.0, %v1622
        %v1624 = vpop.f32.mrb[0].mxu0
        %v1625 = vpop.f32.mrb[0].mxu0
        %v1626 = vpop.f32.mrb[0].mxu0
        %1627 = vdwg.mxu0
        %1628 = vrot.lane.b32.xlu0 %v893, 104
        %v1629 = vpop.permute.xlu0 %1628
        %1630 = vrot.lane.b32.xlu0 %v895, 104
        %v1631 = vpop.permute.xlu0 %1630
        %v1633 = vsel %vm898, %v1629, 0
        %v1636 = vsel %vm898, %v1631, 0
        %1638 = vmatprep.subr.bf16.mxu0 0
        %1639 = vmatpush1.bf16.xpose.msra.mxu0 %v1636
        %1640 = vmatprep.subr.bf16.mxu0 0
        %1641 = vmatpush1.bf16.xpose.msra.mxu0 0
        %1642 = vmatprep.subr.bf16.mxu0 0
        %1643 = vmatpush1.bf16.xpose.msra.mxu0 0
        %1644 = vmatprep.subr.bf16.mxu0 0
        %1645 = vmatpush1.bf16.xpose.msra.mxu0 0
        %1646 = vmatprep.subr.bf16.mxu0 0
        %1647 = vmatpush1.bf16.xpose.msra.mxu0 0
        %1648 = vmatprep.subr.bf16.mxu0 0
        %1649 = vmatpush1.bf16.xpose.msra.mxu0 0
        %1650 = vmatprep.subr.bf16.mxu0 0
        %1651 = vmatpush1.bf16.xpose.msra.mxu0 0
        %1652 = vmatprep.subr.bf16.mxu0 0
        %1653 = vmatpush1.bf16.xpose.msra.mxu0 0
        %1654 = vmatprep.subr.bf16.mxu0 0
        %1655 = vmatpush1.bf16.xpose.msra.mxu0 0
        %1656 = vmatprep.subr.bf16.mxu0 0
        %1657 = vmatpush1.bf16.xpose.msra.mxu0 0
        %1658 = vmatprep.subr.bf16.mxu0 0
        %1659 = vmatpush1.bf16.xpose.msra.mxu0 0
        %1660 = vmatprep.subr.bf16.mxu0 0
        %1661 = vmatpush1.bf16.xpose.msra.mxu0 0
        %1662 = vmatprep.subr.bf16.mxu0 0
        %1663 = vmatpush1.bf16.xpose.msra.mxu0 0
        %1664 = vmatprep.subr.bf16.mxu0 0
        %1665 = vmatpush1.bf16.xpose.msra.mxu0 0
        %1666 = vmatprep.subr.bf16.mxu0 0
        %1667 = vmatpush1.bf16.xpose.msra.mxu0 0
        %1668 = vmatprep.subr.bf16.mxu0 0
        %1669 = vmatpush1.bf16.xpose.msra.mxu0 0
        %1670 = vmatprep.mubr.bf16.mxu0 0
        %1671 = vmatmul.mubr.bf16.gmra.mrb[0].mxu0 %v1633
        %v1672 = vpop.f32.mrb[0].mxu0
        %v1673 = vadd.f32 0.0, %v1672
        %v1674 = vpop.f32.mrb[0].mxu0
        %v1675 = vpop.f32.mrb[0].mxu0
        %v1676 = vpop.f32.mrb[0].mxu0
        %1677 = vdwg.mxu0
        %v1678 = vmul.f32 %v1623, 0.35355338
        %v1679 = vmul.f32 %v1673, 0.35355338
        %v1680 = vadd.f32 %v1678, %v998
        %v1681 = vadd.f32 %v1679, %v1002
        %v1682 = vsel %vm898, %v1680, -inf
        %1683 = vmax.xlane.f32.xlu0 %v1682
        %v1684 = vpop.xlane.xlu0 %1683
        %v1685 = vsel %vm898, %v1681, -inf
        %1686 = vmax.xlane.f32.xlu0 %v1685
        %v1687 = vpop.xlane.xlu0 %1686
        %v1688 = vsub.f32 %v1680, %v1684
        %v1689 = vsub.f32 %v1681, %v1687
        %v1690 = vmul.f32 %v1688, 1.442695
        %v1691 = vpow.pop %v1690
        %v1692 = vmul.f32 %v1689, 1.442695
        %v1693 = vpow.pop %v1692
        %v1694 = vsel %vm898, %v1691, 0.0
        %1695 = vadd.xlane.f32.xlu0 %v1694
        %v1696 = vpop.xlane.xlu0 %1695
        %v1697 = vsel %vm898, %v1693, 0.0
        %1698 = vadd.xlane.f32.xlu0 %v1697
        %v1699 = vpop.xlane.xlu0 %1698
        %v1700 = vrcp.pop %v1696
        %v1701 = vrcp.pop %v1699
        %v1702 = vmul.f32 %v1691, %v1700
        %v1703 = vmul.f32 %v1693, %v1701
        %v1704 = vpack.c.bf16 %v1702, %v1702
        %v1705 = vpack.c.bf16 %v1703, %v1703
        %1706 = vrot.lane.b32.xlu0 %v896, 104
        %v1707 = vpop.permute.xlu0 %1706
        %v1709 = vsel %vm898, %v1704, 0
        %v1712 = vsel %vm1034, %v1707, 0
        %1714 = vmatprep.subr.bf16.mxu0 0
        %1715 = vmatpush1.bf16.msra.mxu0 %v1712
        %1716 = vmatprep.subr.bf16.mxu0 0
        %1717 = vmatpush1.bf16.msra.mxu0 0
        %1718 = vmatprep.subr.bf16.mxu0 0
        %1719 = vmatpush1.bf16.msra.mxu0 0
        %1720 = vmatprep.subr.bf16.mxu0 0
        %1721 = vmatpush1.bf16.msra.mxu0 0
        %1722 = vmatprep.subr.bf16.mxu0 0
        %1723 = vmatpush1.bf16.msra.mxu0 0
        %1724 = vmatprep.subr.bf16.mxu0 0
        %1725 = vmatpush1.bf16.msra.mxu0 0
        %1726 = vmatprep.subr.bf16.mxu0 0
        %1727 = vmatpush1.bf16.msra.mxu0 0
        %1728 = vmatprep.subr.bf16.mxu0 0
        %1729 = vmatpush1.bf16.msra.mxu0 0
        %1730 = vmatprep.subr.bf16.mxu0 0
        %1731 = vmatpush1.bf16.msra.mxu0 0
        %1732 = vmatprep.subr.bf16.mxu0 0
        %1733 = vmatpush1.bf16.msra.mxu0 0
        %1734 = vmatprep.subr.bf16.mxu0 0
        %1735 = vmatpush1.bf16.msra.mxu0 0
        %1736 = vmatprep.subr.bf16.mxu0 0
        %1737 = vmatpush1.bf16.msra.mxu0 0
        %1738 = vmatprep.subr.bf16.mxu0 0
        %1739 = vmatpush1.bf16.msra.mxu0 0
        %1740 = vmatprep.subr.bf16.mxu0 0
        %1741 = vmatpush1.bf16.msra.mxu0 0
        %1742 = vmatprep.subr.bf16.mxu0 0
        %1743 = vmatpush1.bf16.msra.mxu0 0
        %1744 = vmatprep.subr.bf16.mxu0 0
        %1745 = vmatpush1.bf16.msra.mxu0 0
        %1746 = vmatprep.mubr.bf16.mxu0 0
        %1747 = vmatmul.mubr.bf16.gmra.mrb[0].mxu0 %v1709
        %v1748 = vpop.f32.mrb[0].mxu0
        %v1749 = vadd.f32 0.0, %v1748
        %v1750 = vpop.f32.mrb[0].mxu0
        %v1751 = vpop.f32.mrb[0].mxu0
        %v1752 = vpop.f32.mrb[0].mxu0
        %1753 = vdwg.mxu0
        %1754 = vrot.lane.b32.xlu0 %v897, 104
        %v1755 = vpop.permute.xlu0 %1754
        %v1757 = vsel %vm898, %v1705, 0
        %v1760 = vsel %vm1034, %v1755, 0
        %1762 = vmatprep.subr.bf16.mxu0 0
        %1763 = vmatpush1.bf16.msra.mxu0 %v1760
        %1764 = vmatprep.subr.bf16.mxu0 0
        %1765 = vmatpush1.bf16.msra.mxu0 0
        %1766 = vmatprep.subr.bf16.mxu0 0
        %1767 = vmatpush1.bf16.msra.mxu0 0
        %1768 = vmatprep.subr.bf16.mxu0 0
        %1769 = vmatpush1.bf16.msra.mxu0 0
        %1770 = vmatprep.subr.bf16.mxu0 0
        %1771 = vmatpush1.bf16.msra.mxu0 0
        %1772 = vmatprep.subr.bf16.mxu0 0
        %1773 = vmatpush1.bf16.msra.mxu0 0
        %1774 = vmatprep.subr.bf16.mxu0 0
        %1775 = vmatpush1.bf16.msra.mxu0 0
        %1776 = vmatprep.subr.bf16.mxu0 0
        %1777 = vmatpush1.bf16.msra.mxu0 0
        %1778 = vmatprep.subr.bf16.mxu0 0
        %1779 = vmatpush1.bf16.msra.mxu0 0
        %1780 = vmatprep.subr.bf16.mxu0 0
        %1781 = vmatpush1.bf16.msra.mxu0 0
        %1782 = vmatprep.subr.bf16.mxu0 0
        %1783 = vmatpush1.bf16.msra.mxu0 0
        %1784 = vmatprep.subr.bf16.mxu0 0
        %1785 = vmatpush1.bf16.msra.mxu0 0
        %1786 = vmatprep.subr.bf16.mxu0 0
        %1787 = vmatpush1.bf16.msra.mxu0 0
        %1788 = vmatprep.subr.bf16.mxu0 0
        %1789 = vmatpush1.bf16.msra.mxu0 0
        %1790 = vmatprep.subr.bf16.mxu0 0
        %1791 = vmatpush1.bf16.msra.mxu0 0
        %1792 = vmatprep.subr.bf16.mxu0 0
        %1793 = vmatpush1.bf16.msra.mxu0 0
        %1794 = vmatprep.mubr.bf16.mxu0 0
        %1795 = vmatmul.mubr.bf16.gmra.mrb[0].mxu0 %v1757
        %v1796 = vpop.f32.mrb[0].mxu0
        %v1797 = vadd.f32 0.0, %v1796
        %v1798 = vpop.f32.mrb[0].mxu0
        %v1799 = vpop.f32.mrb[0].mxu0
        %v1800 = vpop.f32.mrb[0].mxu0
        %1801 = vdwg.mxu0
        %1804 = vrot.lane.b32.xlu0 %v1300, 8
        %v1805 = vpop.permute.xlu0 %1804
        %1806 = vrot.lane.b32.xlu0 %v1349, 8
        %v1807 = vpop.permute.xlu0 %1806
        %1812 = vrot.lane.b32.xlu0 %v1525, 16
        %v1813 = vpop.permute.xlu0 %1812
        %1814 = vrot.lane.b32.xlu0 %v1573, 16
        %v1815 = vpop.permute.xlu0 %1814
        %1820 = vrot.lane.b32.xlu0 %v1749, 24
        %v1821 = vpop.permute.xlu0 %1820
        %1822 = vrot.lane.b32.xlu0 %v1797, 24
        %v1823 = vpop.permute.xlu0 %1822
        %v1826 = vsel %vm898, %v1073, %v1805
        %v1827 = vsel %vm898, %v1119, %v1807
        %vm1828 = vcmask 130048
        %v1829 = vsel %vm1828, %v1826, %v1813
        %v1830 = vsel %vm1828, %v1827, %v1815
        %vm1831 = vcmask 195584
        %v1832 = vsel %vm1831, %v1829, %v1821
        %v1833 = vsel %vm1831, %v1830, %v1823
        %v1834 = vpack.c.bf16 %v1833, %v1832
        %v1835 = vld [vmem:[#allocation11] sm:$0xf]
        %v1836 = vld [vmem:[#allocation11 + $0x4] sm:$0xf]
        %v1837 = vld [vmem:[#allocation11 + $0x8] sm:$0xf]
        %v1838 = vld [vmem:[#allocation11 + $0xc] sm:$0xf]
        %v1839 = vld [vmem:[#allocation12] sm:$0x1]
        %v1841 = vlaneseq
        %v1842 = vshrl.u32 %v1841, 7
        %v1843 = vsub.s32 0, %v1842
        %v1844 = vrot.slane %v1839, %v1843
        %v1850 = vunpack.c.l.b16 %v1835
        %v1851 = vunpack.c.l.b16 %v1836
        %v1852 = vunpack.c.l.b16 %v1837
        %v1853 = vunpack.c.l.b16 %v1838
        %v1854 = vpack.c.b16 %v1851, %v1850
        %v1855 = vpack.c.b16 %v1853, %v1852
        %v1859 = vsel %vm719, %v1834, 0
        %1861 = vmatprep.subr.bf16.mxu0 0
        %1862 = vmatpush1.bf16.msra.mxu0 %v1854
        %1863 = vmatprep.subr.bf16.mxu0 0
        %1864 = vmatpush1.bf16.msra.mxu0 %v1855
        %1865 = vmatprep.subr.bf16.mxu0 0
        %1866 = vmatpush1.bf16.msra.mxu0 0
        %1867 = vmatprep.subr.bf16.mxu0 0
        %1868 = vmatpush1.bf16.msra.mxu0 0
        %1869 = vmatprep.subr.bf16.mxu0 0
        %1870 = vmatpush1.bf16.msra.mxu0 0
        %1871 = vmatprep.subr.bf16.mxu0 0
        %1872 = vmatpush1.bf16.msra.mxu0 0
        %1873 = vmatprep.subr.bf16.mxu0 0
        %1874 = vmatpush1.bf16.msra.mxu0 0
        %1875 = vmatprep.subr.bf16.mxu0 0
        %1876 = vmatpush1.bf16.msra.mxu0 0
        %1877 = vmatprep.subr.bf16.mxu0 0
        %1878 = vmatpush1.bf16.msra.mxu0 0
        %1879 = vmatprep.subr.bf16.mxu0 0
        %1880 = vmatpush1.bf16.msra.mxu0 0
        %1881 = vmatprep.subr.bf16.mxu0 0
        %1882 = vmatpush1.bf16.msra.mxu0 0
        %1883 = vmatprep.subr.bf16.mxu0 0
        %1884 = vmatpush1.bf16.msra.mxu0 0
        %1885 = vmatprep.subr.bf16.mxu0 0
        %1886 = vmatpush1.bf16.msra.mxu0 0
        %1887 = vmatprep.subr.bf16.mxu0 0
        %1888 = vmatpush1.bf16.msra.mxu0 0
        %1889 = vmatprep.subr.bf16.mxu0 0
        %1890 = vmatpush1.bf16.msra.mxu0 0
        %1891 = vmatprep.subr.bf16.mxu0 0
        %1892 = vmatpush1.bf16.msra.mxu0 0
        %1893 = vmatprep.mubr.bf16.mxu0 0
        %1894 = vmatmul.mubr.bf16.gmra.mrb[0].mxu0 %v1859
        %v1895 = vpop.f32.mrb[0].mxu0
        %v1896 = vadd.f32 %v1844, %v1895
        %v1897 = vpop.f32.mrb[0].mxu0
        %v1898 = vpop.f32.mrb[0].mxu0
        %v1899 = vadd.f32 %v1844, %v1898
        %v1900 = vpop.f32.mrb[0].mxu0
        %1901 = vdwg.mxu0
        %v1902 = vadd.f32 %v691, %v1896
        %v1903 = vadd.f32 %v692, %v1899
        %v1904 = vld [vmem:[%s10] sm:$0x1]
        %v1905 = vld [vmem:[%s11] sm:$0x1]
        %v1906 = vsel %vm719, %v1902, 0.0
        %1907 = vadd.xlane.f32.xlu0 %v1906
        %v1908 = vpop.xlane.xlu0 %1907
        %v1909 = vsel %vm719, %v1903, 0.0
        %1910 = vadd.xlane.f32.xlu0 %v1909
        %v1911 = vpop.xlane.xlu0 %1910
        %v1912 = vrcp.pop 32.0
        %v1913 = vmul.f32 %v1908, %v1912
        %v1914 = vmul.f32 %v1911, %v1912
        %v1915 = vsub.f32 %v1902, %v1913
        %v1916 = vsub.f32 %v1903, %v1914
        %v1917 = vmul.f32 %v1915, %v1915
        %v1918 = vmul.f32 %v1916, %v1916
        %v1919 = vsel %vm719, %v1917, 0.0
        %1920 = vadd.xlane.f32.xlu0 %v1919
        %v1921 = vpop.xlane.xlu0 %1920
        %v1922 = vsel %vm719, %v1918, 0.0
        %1923 = vadd.xlane.f32.xlu0 %v1922
        %v1924 = vpop.xlane.xlu0 %1923
        %v1925 = vmul.f32 %v1921, %v1912
        %v1926 = vmul.f32 %v1924, %v1912
        %v1927 = vadd.f32 %v1925, 1e-12
        %v1928 = vadd.f32 %v1926, 1e-12
        %v1929 = vrsqrt.pop %v1927
        %v1930 = vrsqrt.pop %v1928
        %v1931 = vmul.f32 %v1915, %v1929
        %v1932 = vmul.f32 %v1916, %v1930
        %v1934 = vlaneseq
        %v1935 = vshrl.u32 %v1934, 7
        %v1936 = vsub.s32 0, %v1935
        %v1937 = vrot.slane %v1904, %v1936
        %v1939 = vmul.f32 %v1931, %v1937
        %v1940 = vmul.f32 %v1932, %v1937
        %v1942 = vlaneseq
        %v1943 = vshrl.u32 %v1942, 7
        %v1944 = vsub.s32 0, %v1943
        %v1945 = vrot.slane %v1905, %v1944
        %v1947 = vadd.f32 %v1939, %v1945
        %v1948 = vadd.f32 %v1940, %v1945
        %v1949 = vpack.c.bf16 %v1948, %v1947
        %v1950 = vld [vmem:[%s12] sm:$0xf]
        %v1951 = vld [vmem:[%s12 + $0x4] sm:$0xf]
        %v1952 = vld [vmem:[%s12 + $0x8] sm:$0xf]
        %v1953 = vld [vmem:[%s12 + $0xc] sm:$0xf]
        %v1954 = vld [vmem:[%s13] sm:$0x1]
        %v1956 = vlaneseq
        %v1957 = vshrl.u32 %v1956, 7
        %v1958 = vsub.s32 0, %v1957
        %v1959 = vrot.slane %v1954, %v1958
        %v1965 = vunpack.c.l.b16 %v1950
        %v1966 = vunpack.c.l.b16 %v1951
        %v1967 = vunpack.c.l.b16 %v1952
        %v1968 = vunpack.c.l.b16 %v1953
        %v1969 = vpack.c.b16 %v1966, %v1965
        %v1970 = vpack.c.b16 %v1968, %v1967
        %v1974 = vsel %vm719, %v1949, 0
        %1976 = vmatprep.subr.bf16.mxu0 0
        %1977 = vmatpush1.bf16.msra.mxu0 %v1969
        %1978 = vmatprep.subr.bf16.mxu0 0
        %1979 = vmatpush1.bf16.msra.mxu0 %v1970
        %1980 = vmatprep.subr.bf16.mxu0 0
        %1981 = vmatpush1.bf16.msra.mxu0 0
        %1982 = vmatprep.subr.bf16.mxu0 0
        %1983 = vmatpush1.bf16.msra.mxu0 0
        %1984 = vmatprep.subr.bf16.mxu0 0
        %1985 = vmatpush1.bf16.msra.mxu0 0
        %1986 = vmatprep.subr.bf16.mxu0 0
        %1987 = vmatpush1.bf16.msra.mxu0 0
        %1988 = vmatprep.subr.bf16.mxu0 0
        %1989 = vmatpush1.bf16.msra.mxu0 0
        %1990 = vmatprep.subr.bf16.mxu0 0
        %1991 = vmatpush1.bf16.msra.mxu0 0
        %1992 = vmatprep.subr.bf16.mxu0 0
        %1993 = vmatpush1.bf16.msra.mxu0 0
        %1994 = vmatprep.subr.bf16.mxu0 0
        %1995 = vmatpush1.bf16.msra.mxu0 0
        %1996 = vmatprep.subr.bf16.mxu0 0
        %1997 = vmatpush1.bf16.msra.mxu0 0
        %1998 = vmatprep.subr.bf16.mxu0 0
        %1999 = vmatpush1.bf16.msra.mxu0 0
        %2000 = vmatprep.subr.bf16.mxu0 0
        %2001 = vmatpush1.bf16.msra.mxu0 0
        %2002 = vmatprep.subr.bf16.mxu0 0
        %2003 = vmatpush1.bf16.msra.mxu0 0
        %2004 = vmatprep.subr.bf16.mxu0 0
        %2005 = vmatpush1.bf16.msra.mxu0 0
        %2006 = vmatprep.subr.bf16.mxu0 0
        %2007 = vmatpush1.bf16.msra.mxu0 0
        %2008 = vmatprep.mubr.bf16.mxu0 0
        %2009 = vmatmul.mubr.bf16.gmra.mrb[0].mxu0 %v1974
        %v2010 = vpop.f32.mrb[0].mxu0
        %v2011 = vadd.f32 %v1959, %v2010
        %v2012 = vpop.f32.mrb[0].mxu0
        %v2013 = vpop.f32.mrb[0].mxu0
        %v2014 = vadd.f32 %v1959, %v2013
        %v2015 = vpop.f32.mrb[0].mxu0
        %2016 = vdwg.mxu0
        %v2017 = vmul.f32 %v2011, 0.5
        %v2018 = vmul.f32 %v2014, 0.5
        %v2019 = vmul.f32 %v2011, 0.70710677
        %v2020 = vmul.f32 %v2014, 0.70710677
        %v2021 = verf.f32.pop %v2019
        %v2022 = verf.f32.pop %v2020
        %v2023 = vadd.f32 %v2021, 1.0
        %v2024 = vadd.f32 %v2022, 1.0
        %v2025 = vmul.f32 %v2017, %v2023
        %v2026 = vmul.f32 %v2018, %v2024
        %v2027 = vpack.c.bf16 %v2026, %v2025
        %v2028 = vld [vmem:[%s14] sm:$0xf]
        %v2029 = vld [vmem:[%s14 + $0x4] sm:$0xf]
        %v2030 = vld [vmem:[%s14 + $0x8] sm:$0xf]
        %v2031 = vld [vmem:[%s14 + $0xc] sm:$0xf]
        %v2032 = vld [vmem:[%s14 + $0x10] sm:$0xf]
        %v2033 = vld [vmem:[%s14 + $0x14] sm:$0xf]
        %v2034 = vld [vmem:[%s14 + $0x18] sm:$0xf]
        %v2035 = vld [vmem:[%s14 + $0x1c] sm:$0xf]
        %v2036 = vld [vmem:[%s15] sm:$0x1]
        %v2038 = vlaneseq
        %v2039 = vshrl.u32 %v2038, 7
        %v2040 = vsub.s32 0, %v2039
        %v2041 = vrot.slane %v2036, %v2040
        %v2051 = vunpack.c.l.b16 %v2028
        %v2052 = vunpack.c.l.b16 %v2029
        %v2053 = vunpack.c.l.b16 %v2030
        %v2054 = vunpack.c.l.b16 %v2031
        %v2055 = vunpack.c.l.b16 %v2032
        %v2056 = vunpack.c.l.b16 %v2033
        %v2057 = vunpack.c.l.b16 %v2034
        %v2058 = vunpack.c.l.b16 %v2035
        %v2059 = vpack.c.b16 %v2052, %v2051
        %v2060 = vpack.c.b16 %v2054, %v2053
        %v2061 = vpack.c.b16 %v2056, %v2055
        %v2062 = vpack.c.b16 %v2058, %v2057
        %vm2067 = vcmask 523264
        %v2069 = vsel %vm2067, %v2027, 0
        %2071 = vmatprep.subr.bf16.mxu0 0
        %2072 = vmatpush1.bf16.msra.mxu0 %v2059
        %2073 = vmatprep.subr.bf16.mxu0 0
        %2074 = vmatpush1.bf16.msra.mxu0 %v2060
        %2075 = vmatprep.subr.bf16.mxu0 0
        %2076 = vmatpush1.bf16.msra.mxu0 %v2061
        %2077 = vmatprep.subr.bf16.mxu0 0
        %2078 = vmatpush1.bf16.msra.mxu0 %v2062
        %2079 = vmatprep.subr.bf16.mxu0 0
        %2080 = vmatpush1.bf16.msra.mxu0 0
        %2081 = vmatprep.subr.bf16.mxu0 0
        %2082 = vmatpush1.bf16.msra.mxu0 0
        %2083 = vmatprep.subr.bf16.mxu0 0
        %2084 = vmatpush1.bf16.msra.mxu0 0
        %2085 = vmatprep.subr.bf16.mxu0 0
        %2086 = vmatpush1.bf16.msra.mxu0 0
        %2087 = vmatprep.subr.bf16.mxu0 0
        %2088 = vmatpush1.bf16.msra.mxu0 0
        %2089 = vmatprep.subr.bf16.mxu0 0
        %2090 = vmatpush1.bf16.msra.mxu0 0
        %2091 = vmatprep.subr.bf16.mxu0 0
        %2092 = vmatpush1.bf16.msra.mxu0 0
        %2093 = vmatprep.subr.bf16.mxu0 0
        %2094 = vmatpush1.bf16.msra.mxu0 0
        %2095 = vmatprep.subr.bf16.mxu0 0
        %2096 = vmatpush1.bf16.msra.mxu0 0
        %2097 = vmatprep.subr.bf16.mxu0 0
        %2098 = vmatpush1.bf16.msra.mxu0 0
        %2099 = vmatprep.subr.bf16.mxu0 0
        %2100 = vmatpush1.bf16.msra.mxu0 0
        %2101 = vmatprep.subr.bf16.mxu0 0
        %2102 = vmatpush1.bf16.msra.mxu0 0
        %2103 = vmatprep.mubr.bf16.mxu0 0
        %2104 = vmatmul.mubr.bf16.gmra.mrb[0].mxu0 %v2069
        %v2105 = vpop.f32.mrb[0].mxu0
        %v2106 = vadd.f32 %v2041, %v2105
        %v2107 = vpop.f32.mrb[0].mxu0
        %v2108 = vpop.f32.mrb[0].mxu0
        %v2109 = vadd.f32 %v2041, %v2108
        %v2110 = vpop.f32.mrb[0].mxu0
        %2111 = vdwg.mxu0
        %v2112 = vadd.f32 %v1947, %v2106
        %v2113 = vadd.f32 %v1948, %v2109
        %v2114 = vld [vmem:[%s16] sm:$0x1]
        %v2115 = vld [vmem:[%s17] sm:$0x1]
        %v2116 = vsel %vm719, %v2112, 0.0
        %2117 = vadd.xlane.f32.xlu0 %v2116
        %v2118 = vpop.xlane.xlu0 %2117
        %v2119 = vsel %vm719, %v2113, 0.0
        %2120 = vadd.xlane.f32.xlu0 %v2119
        %v2121 = vpop.xlane.xlu0 %2120
        %v2122 = vmul.f32 %v2118, %v1912
        %v2123 = vmul.f32 %v2121, %v1912
        %v2124 = vsub.f32 %v2112, %v2122
        %v2125 = vsub.f32 %v2113, %v2123
        %v2126 = vmul.f32 %v2124, %v2124
        %v2127 = vmul.f32 %v2125, %v2125
        %v2128 = vsel %vm719, %v2126, 0.0
        %2129 = vadd.xlane.f32.xlu0 %v2128
        %v2130 = vpop.xlane.xlu0 %2129
        %v2131 = vsel %vm719, %v2127, 0.0
        %2132 = vadd.xlane.f32.xlu0 %v2131
        %v2133 = vpop.xlane.xlu0 %2132
        %v2134 = vmul.f32 %v2130, %v1912
        %v2135 = vmul.f32 %v2133, %v1912
        %v2136 = vadd.f32 %v2134, 1e-12
        %v2137 = vadd.f32 %v2135, 1e-12
        %v2138 = vrsqrt.pop %v2136
        %v2139 = vrsqrt.pop %v2137
        %v2140 = vmul.f32 %v2124, %v2138
        %v2141 = vmul.f32 %v2125, %v2139
        %v2143 = vlaneseq
        %v2144 = vshrl.u32 %v2143, 7
        %v2145 = vsub.s32 0, %v2144
        %v2146 = vrot.slane %v2114, %v2145
        %v2148 = vmul.f32 %v2140, %v2146
        %v2149 = vmul.f32 %v2141, %v2146
        %v2151 = vlaneseq
        %v2152 = vshrl.u32 %v2151, 7
        %v2153 = vsub.s32 0, %v2152
        %v2154 = vrot.slane %v2115, %v2153
        %v2156 = vadd.f32 %v2148, %v2154
        %v2157 = vadd.f32 %v2149, %v2154
        %2158 = vst.msk [vmem:[#allocation2] sm:$0xff] %vm719, %v2156
        %2159 = vst.msk [vmem:[#allocation2 + $0x8] sm:$0xff] %vm719, %v2157
        %p2160 = scmp.eq.s32.totalorder %s39, 2
        // Predicated region
        $region121: #{tpu_custom_call.1} parent=91 // pred_check
          %p2161 = pneg %p2160
        $region122: #{tpu_custom_call.1} parent=91 // pred_check_branch
          %2163 = sbr.rel (%p2161) target = $region124
        $region123: #{tpu_custom_call.1} parent=91 // pred_region
          %2164 = vst.msk [vmem:[#allocation14] sm:$0xff] %vm719, %v2156
          %2165 = vst.msk [vmem:[#allocation14 + $0x8] sm:$0xff] %vm719, %v2157
        $region124: #{tpu_custom_call.1} parent=91 // pred_fallthru
          _
        // Predicated region
        $region125: #{tpu_custom_call.1} parent=91 // pred_check
          %p2166 = pneg %p452
        $region126: #{tpu_custom_call.1} parent=91 // pred_check_branch
          %2168 = sbr.rel (%p2166) target = $region128
        $region127: #{tpu_custom_call.1} parent=91 // pred_region
          %s2169 = smul.u32 2, %s38
          %s2171 = ssub.s32 256, 256
          %2172 = vsyncadd [#allocation5], %s2171
          %s2173 = smul.addr %s2169, 128
          %s2174 = scalar_lea.hbm %s18, %s2173
          %s2175 = sshll.u32 [#allocation14], 4
          %s2176 = int_to_ptr.vmem [resolvable:$true] %s2175
          %2181 = dma.vmem_to_hbm [thread:$0]  %s2176, 256, %s2174, [#allocation5], 128, 128, 8
        $region128: #{tpu_custom_call.1} parent=91 // pred_fallthru
          _
        // Predicated region
        $region129: #{tpu_custom_call.1} parent=91 // pred_check
          %p2182 = pneg %p452
        $region130: #{tpu_custom_call.1} parent=91 // pred_check_branch
          %2184 = sbr.rel (%p2182) target = $region132
        $region131: #{tpu_custom_call.1} parent=91 // pred_region
          %2185 = dma.done [#allocation5], 256
        $region132: #{tpu_custom_call.1} parent=91 // pred_fallthru
          _
      $region92: #{tpu_custom_call.1} parent=5 // pred_fallthru
        _
      %p2186 = scmp.le.s32.totalorder 2, %s29
      // Predicated region
      $region133: #{tpu_custom_call.1} parent=5 // pred_check
        %p2187 = pneg %p2186
      $region134: #{tpu_custom_call.1} parent=5 // pred_check_branch
        %2189 = sbr.rel (%p2187) target = $region136
      $region135: #{tpu_custom_call.1} parent=5 // pred_region
        %s2190 = ssub.s32 %s29, 2
      $region136: #{tpu_custom_call.1} parent=5 // pred_fallthru
        _
    $region6: #{tpu_custom_call.1} parent=1 // loop_footer
      %s33 = sadd.s32 1, %s29
    $region7: #{tpu_custom_call.1} parent=1 // loop_footer_branch
      %28 = sbr.rel target = $region3
    $region8: #{tpu_custom_call.1} parent=1 // loop_exit
      _
    %2191 = vsyncpa [#allocation4], 1
    %s2192 = scalar_lea.sflag [#allocation4], 1
    %2193 = vsyncpa %s2192, 1
    %2194 = vsyncpa [#allocation7], 1
    %2195 = vsyncpa [#allocation10], 1
    %2196 = vsyncpa [#allocation13], 1
    %2197 = vsyncpa [#allocation5], 1
    %s2198 = scalar_lea.sflag [#allocation5], 1
    %2199 = vsyncpa %s2198, 1

</llo_original>
